<compile_context>
chip_gen: v6e
topology: v6e:2x2x1
jax: 0.10.0
libtpu: 0.0.40
codegen_flags: <defaults>
</compile_context>

<pallas_src>
import numpy as np

import jax
import jax.numpy as jnp
from jax.experimental import pallas as pl
from jax.experimental.pallas import tpu as pltpu


def _round_up(v, m):
    return -(-v // m) * m


def _adaptive_bounds(in_size, out_size):
    """PyTorch AdaptiveMaxPool window bounds (static python ints)."""
    starts = [(i * in_size) // out_size for i in range(out_size)]
    ends = [-(-((i + 1) * in_size) // out_size) for i in range(out_size)]  # ceil div
    return list(zip(starts, ends))


def _build_selection_mats(h, w, oh, ow):
    """Constant 0/1 gather matrices for separable adaptive max pooling.

    sw : (H*W,        kw*pad_how)   k-th W-window element gather, k blocks concat
    sh : (pad_how,    kh*pad_ohw)   k-th H-window element gather, k blocks concat
    Each per-k column block is padded to a multiple of 128 lanes so result slabs
    are tile-aligned; window clamping only repeats an in-window element so the
    running max is unaffected.  Returned in bf16 (0/1 is exactly representable).
    """
    hb = _adaptive_bounds(h, oh)
    wb = _adaptive_bounds(w, ow)
    kh = max(e - s for s, e in hb)
    kw = max(e - s for s, e in wb)
    how = h * ow
    ohw = oh * ow
    pad_how = _round_up(how, 128)
    pad_ohw = _round_up(ohw, 128)

    sw = np.zeros((h * w, kw * pad_how), np.float32)
    for k in range(kw):
        for r in range(h):
            for j, (ws, we) in enumerate(wb):
                src = r * w + ws + min(k, we - ws - 1)
                sw[src, k * pad_how + r * ow + j] = 1.0

    sh = np.zeros((pad_how, kh * pad_ohw), np.float32)
    for k in range(kh):
        for i, (hs, he) in enumerate(hb):
            for j in range(ow):
                src = (hs + min(k, he - hs - 1)) * ow + j
                sh[src, k * pad_ohw + i * ow + j] = 1.0

    return (jnp.asarray(sw, dtype=jnp.bfloat16),
            jnp.asarray(sh, dtype=jnp.bfloat16),
            kw, kh, pad_how, pad_ohw)


def _make_kernel(kw, kh, pad_how, pad_ohw):
    def kernel(x_ref, sw_ref, sh_ref, w_ref, b_ref, o_ref):
        bsz, c_in, hw = x_ref.shape
        m0 = bsz * c_in
        exact_bf16 = x_ref.dtype == jnp.bfloat16

        # (block_n, C_in, H*W) -> (block_n*C_in, H*W); C_in % 8 == 0 so layout-free.
        x = x_ref[...].reshape(m0, hw)

        def gather_max(vals, sel, num, pad_cols, vals_exact_bf16):
            # One wide bf16 0/1 gather matmul per stage; window max is a
            # jnp.maximum over lane-aligned column slabs of the result.
            if vals_exact_bf16:
                r = jnp.dot(vals.astype(jnp.bfloat16), sel,
                            preferred_element_type=jnp.float32)
                g = r
            else:
                # hi is exactly bf16; lo is the (bf16-rounded) remainder, so the
                # gather has ~2^-17 relative error -- well inside test tolerance.
                hi = vals.astype(jnp.bfloat16)
                lo = (vals - hi.astype(jnp.float32)).astype(jnp.bfloat16)
                op = jnp.concatenate([hi, lo], axis=0)           # (2*M0, cols)
                r = jnp.dot(op, sel, preferred_element_type=jnp.float32)
                g = r[:m0, :] + r[m0:, :]                        # (M0, num*pad_cols)
            acc = g[:, :pad_cols]
            for k in range(1, num):
                acc = jnp.maximum(acc, g[:, k * pad_cols:(k + 1) * pad_cols])
            return acc

        xv = x if exact_bf16 else x.astype(jnp.float32)
        # Stage 1: max over W windows -> (M0, pad_how)
        rowmax = gather_max(xv, sw_ref[...], kw, pad_how, exact_bf16)
        # Stage 2: max over H windows -> (M0, pad_ohw).  In the bf16 fast path the
        # stage-1 results are exact bf16 values, so no split is needed here either.
        pooled = gather_max(rowmax, sh_ref[...], kh, pad_ohw, exact_bf16)

        # 1x1 conv for the whole batch tile in a single matmul: block-diagonal
        # weight (bsz*C_out, bsz*C_in) @ pooled (bsz*C_in, pad_ohw), plus bias.
        out = jnp.dot(w_ref[...], pooled, preferred_element_type=jnp.float32)
        out = out + b_ref[...]                                    # (bsz*C_out, 1)
        o_ref[...] = out.reshape(o_ref.shape).astype(o_ref.dtype)

    return kernel


def _pick_block_n(n):
    """Batch elements per grid step.

    Sized for MXU row occupancy (block_n * C_in matmul rows), not for
    manufacturing grid steps: on v5e/v6e the grid is a serial loop, and on v7x
    megacore-splitting a microsecond-scale kernel costs more in per-step overhead
    than the second TC recovers unless each step still has >= 256 rows.  VMEM is
    not the limiter (~3 MB / step vs 32 MiB scoped).
    """
    if n <= 8:
        return n                 # one fat step
    for cand in (8, 4, 2):       # cand >= 4 gives >= 256 rows with C_in = 64
        if n % cand == 0:
            return cand
    return 1


def ginka_output(x, w, b, out_size=(13, 13), block_n=None):
    n, c_in, h, w_sp = x.shape
    if w.ndim == 4:              # PyTorch Conv2d weight is (C_out, C_in, 1, 1)
        w = w.reshape(w.shape[0], w.shape[1])
    c_out = w.shape[0]
    assert w.shape[1] == c_in, "conv weight C_in mismatch"
    assert c_in % 8 == 0, "C_in must be a multiple of 8 for the layout-free reshape"
    oh, ow = out_size
    hw = h * w_sp
    ohw = oh * ow

    if block_n is None:
        block_n = _pick_block_n(n)
    assert n % block_n == 0, "batch must be divisible by block_n"

    sel_w, sel_h, kw, kh, pad_how, pad_ohw = _build_selection_mats(h, w_sp, oh, ow)

    # Block-diagonal conv weight / tiled bias: the 1x1 conv of the whole batch
    # tile becomes one matmul on the (b, c)-row pooled slab.
    w_bd = jnp.kron(jnp.eye(block_n, dtype=jnp.float32), w.astype(jnp.float32))
    b_rep = jnp.tile(b.astype(jnp.float32).reshape(c_out, 1), (block_n, 1))

    # Free HBM reshape, native dtype (no wrapper up-cast; cast happens in-kernel).
    x_flat = x.reshape(n, c_in, hw)

    kernel = _make_kernel(kw, kh, pad_how, pad_ohw)

    out_pad = pl.pallas_call(
        kernel,
        out_shape=jax.ShapeDtypeStruct((n, c_out, pad_ohw), x.dtype),
        grid_spec=pltpu.PrefetchScalarGridSpec(
            num_scalar_prefetch=0,
            grid=(n // block_n,),
            in_specs=[
                pl.BlockSpec((block_n, c_in, hw), lambda i: (i, 0, 0)),
                pl.BlockSpec((hw, kw * pad_how), lambda i: (0, 0)),
                pl.BlockSpec((pad_how, kh * pad_ohw), lambda i: (0, 0)),
                pl.BlockSpec((block_n * c_out, block_n * c_in), lambda i: (0, 0)),
                pl.BlockSpec((block_n * c_out, 1), lambda i: (0, 0)),
            ],
            out_specs=pl.BlockSpec((block_n, c_out, pad_ohw), lambda i: (i, 0, 0)),
        ),
        compiler_params=pltpu.CompilerParams(
            dimension_semantics=("parallel",),
        ),
    )(x_flat, sel_w, sel_h, w_bd, b_rep)

    # Slice the lane padding off and restore NCHW output layout (tiny HBM op).
    return out_pad[:, :, :ohw].reshape(n, c_out, oh, ow)


def _reference(x, w, b, out_size=(13, 13)):
    """Pure-JAX reference replicating AdaptiveMaxPool2d + 1x1 Conv2d."""
    if w.ndim == 4:
        w = w.reshape(w.shape[0], w.shape[1])
    n, c_in, h, w_sp = x.shape
    oh, ow = out_size
    hb = _adaptive_bounds(h, oh)
    wb = _adaptive_bounds(w_sp, ow)
    pooled_h = jnp.stack(
        [jnp.max(x[:, :, hs:he, :], axis=2) for (hs, he) in hb], axis=2
    )  # (N, C_in, OH, W)
    pooled = jnp.stack(
        [jnp.max(pooled_h[:, :, :, ws:we], axis=3) for (ws, we) in wb], axis=3
    )  # (N, C_in, OH, OW)
    out = jnp.einsum("oc,ncij->noij", w, pooled,
                     precision=jax.lax.Precision.HIGHEST)
    return out + b[None, :, None, None]


if __name__ == "__main__":
    in_ch, out_ch = 64, 32
    out_size = (13, 13)
    N, H, W = 2, 16, 16

    key = jax.random.PRNGKey(0)
    k_x, k_w, k_b = jax.random.split(key, 3)

    x = jax.random.normal(k_x, (N, in_ch, H, W), dtype=jnp.float32)
    # PyTorch Conv2d(in_ch, out_ch, 1) parameter shapes.
    w = jax.random.normal(k_w, (out_ch, in_ch, 1, 1), dtype=jnp.float32) * 0.05
    b = jax.random.normal(k_b, (out_ch,), dtype=jnp.float32) * 0.05

    out = ginka_output(x, w, b, out_size)
    out = jax.block_until_ready(out)

    ref = _reference(x, w, b, out_size)
    assert out.shape == (N, out_ch, out_size[0], out_size[1])
    # Tolerance covers MXU bf16 input rounding of the small f32 conv matmul.
    assert jnp.allclose(out, ref, atol=2e-3, rtol=2e-3), "mismatch vs reference"

    print("KERNEL_OK")
</pallas_src>

<mosaic_0001>
module attributes {stable_mosaic.version = 11 : i64} {
  func.func @kernel(%arg0: i32, %arg1: memref<2x64x256xf32, #tpu.memory_space<vmem>>, %arg2: memref<256x768xbf16, #tpu.memory_space<vmem>>, %arg3: memref<256x768xbf16, #tpu.memory_space<vmem>>, %arg4: memref<64x128xf32, #tpu.memory_space<vmem>>, %arg5: memref<64x1xf32, #tpu.memory_space<vmem>>, %arg6: memref<2x32x256xf32, #tpu.memory_space<vmem>>) attributes {dimension_semantics = [#tpu.dimension_semantics<parallel>], iteration_bounds = array<i64: 1>, scalar_prefetch = 0 : i64, scratch_operands = 0 : i64, tpu.core_type = #tpu.core_type<tc>, window_params = [{transform_indices = @transform_0, window_bounds = array<i64: 2, 64, 256>}, {pipeline_mode = #tpu.pipeline_mode<synchronous>, transform_indices = @transform_1, window_bounds = array<i64: 256, 768>}, {pipeline_mode = #tpu.pipeline_mode<synchronous>, transform_indices = @transform_2, window_bounds = array<i64: 256, 768>}, {pipeline_mode = #tpu.pipeline_mode<synchronous>, transform_indices = @transform_3, window_bounds = array<i64: 64, 128>}, {pipeline_mode = #tpu.pipeline_mode<synchronous>, transform_indices = @transform_4, window_bounds = array<i64: 64, 1>}, {transform_indices = @transform_5, window_bounds = array<i64: 2, 32, 256>}]} {
    %c0 = arith.constant 0 : index
    %c0_0 = arith.constant 0 : index
    %c0_1 = arith.constant 0 : index
    %0 = vector.load %arg1[%c0, %c0_0, %c0_1] : memref<2x64x256xf32, #tpu.memory_space<vmem>>, vector<2x64x256xf32>
    %1 = vector.shape_cast %0 : vector<2x64x256xf32> to vector<128x256xf32>
    %c0_2 = arith.constant 0 : index
    %c0_3 = arith.constant 0 : index
    %2 = vector.load %arg2[%c0_2, %c0_3] : memref<256x768xbf16, #tpu.memory_space<vmem>>, vector<256x768xbf16>
    %3 = arith.truncf %1 : vector<128x256xf32> to vector<128x256xbf16>
    %4 = arith.extf %3 : vector<128x256xbf16> to vector<128x256xf32>
    %5 = arith.subf %1, %4 : vector<128x256xf32>
    %6 = arith.truncf %5 : vector<128x256xf32> to vector<128x256xbf16>
    %7 = tpu.concatenate %3, %6 in 0 : vector<128x256xbf16>, vector<128x256xbf16> -> vector<256x256xbf16>
    %cst = arith.constant dense<0.000000e+00> : vector<256x768xf32>
    %8 = tpu.matmul %7, %2, %cst {dimension_numbers = #tpu.dot_dimension_numbers<[1], [0], [0], [1], [0, 0, 1, 1], [], []>} : vector<256x256xbf16>, vector<256x768xbf16>, vector<256x768xf32> -> vector<256x768xf32>
    %9 = vector.extract_strided_slice %8 {offsets = [0, 0], sizes = [128, 768], strides = [1, 1]} : vector<256x768xf32> to vector<128x768xf32>
    %10 = vector.extract_strided_slice %8 {offsets = [128, 0], sizes = [128, 768], strides = [1, 1]} : vector<256x768xf32> to vector<128x768xf32>
    %11 = arith.addf %9, %10 : vector<128x768xf32>
    %12 = vector.extract_strided_slice %11 {offsets = [0, 0], sizes = [128, 256], strides = [1, 1]} : vector<128x768xf32> to vector<128x256xf32>
    %13 = vector.extract_strided_slice %11 {offsets = [0, 256], sizes = [128, 256], strides = [1, 1]} : vector<128x768xf32> to vector<128x256xf32>
    %14 = arith.maximumf %12, %13 : vector<128x256xf32>
    %15 = vector.extract_strided_slice %11 {offsets = [0, 512], sizes = [128, 256], strides = [1, 1]} : vector<128x768xf32> to vector<128x256xf32>
    %16 = arith.maximumf %14, %15 : vector<128x256xf32>
    %c0_4 = arith.constant 0 : index
    %c0_5 = arith.constant 0 : index
    %17 = vector.load %arg3[%c0_4, %c0_5] : memref<256x768xbf16, #tpu.memory_space<vmem>>, vector<256x768xbf16>
    %18 = arith.truncf %16 : vector<128x256xf32> to vector<128x256xbf16>
    %19 = arith.extf %18 : vector<128x256xbf16> to vector<128x256xf32>
    %20 = arith.subf %16, %19 : vector<128x256xf32>
    %21 = arith.truncf %20 : vector<128x256xf32> to vector<128x256xbf16>
    %22 = tpu.concatenate %18, %21 in 0 : vector<128x256xbf16>, vector<128x256xbf16> -> vector<256x256xbf16>
    %cst_6 = arith.constant dense<0.000000e+00> : vector<256x768xf32>
    %23 = tpu.matmul %22, %17, %cst_6 {dimension_numbers = #tpu.dot_dimension_numbers<[1], [0], [0], [1], [0, 0, 1, 1], [], []>} : vector<256x256xbf16>, vector<256x768xbf16>, vector<256x768xf32> -> vector<256x768xf32>
    %24 = vector.extract_strided_slice %23 {offsets = [0, 0], sizes = [128, 768], strides = [1, 1]} : vector<256x768xf32> to vector<128x768xf32>
    %25 = vector.extract_strided_slice %23 {offsets = [128, 0], sizes = [128, 768], strides = [1, 1]} : vector<256x768xf32> to vector<128x768xf32>
    %26 = arith.addf %24, %25 : vector<128x768xf32>
    %27 = vector.extract_strided_slice %26 {offsets = [0, 0], sizes = [128, 256], strides = [1, 1]} : vector<128x768xf32> to vector<128x256xf32>
    %28 = vector.extract_strided_slice %26 {offsets = [0, 256], sizes = [128, 256], strides = [1, 1]} : vector<128x768xf32> to vector<128x256xf32>
    %29 = arith.maximumf %27, %28 : vector<128x256xf32>
    %30 = vector.extract_strided_slice %26 {offsets = [0, 512], sizes = [128, 256], strides = [1, 1]} : vector<128x768xf32> to vector<128x256xf32>
    %31 = arith.maximumf %29, %30 : vector<128x256xf32>
    %c0_7 = arith.constant 0 : index
    %c0_8 = arith.constant 0 : index
    %32 = vector.load %arg4[%c0_7, %c0_8] : memref<64x128xf32, #tpu.memory_space<vmem>>, vector<64x128xf32>
    %cst_9 = arith.constant dense<0.000000e+00> : vector<64x256xf32>
    %33 = tpu.matmul %32, %31, %cst_9 {dimension_numbers = #tpu.dot_dimension_numbers<[1], [0], [0], [1], [0, 0, 1, 1], [], []>} : vector<64x128xf32>, vector<128x256xf32>, vector<64x256xf32> -> vector<64x256xf32>
    %c0_10 = arith.constant 0 : index
    %c0_11 = arith.constant 0 : index
    %34 = vector.load %arg5[%c0_10, %c0_11] : memref<64x1xf32, #tpu.memory_space<vmem>>, vector<64x1xf32>
    %35 = vector.broadcast %34 : vector<64x1xf32> to vector<64x256xf32>
    %36 = arith.addf %33, %35 : vector<64x256xf32>
    %37 = vector.shape_cast %36 : vector<64x256xf32> to vector<2x32x256xf32>
    %c0_12 = arith.constant 0 : index
    %c0_13 = arith.constant 0 : index
    %c0_14 = arith.constant 0 : index
    %38 = vector.load %arg6[%c0_12, %c0_13, %c0_14] : memref<2x32x256xf32, #tpu.memory_space<vmem>>, vector<2x32x256xf32>
    tpu.vector_store %arg6[%c0_12, %c0_13, %c0_14], %37 {strides = array<i32>} : memref<2x32x256xf32, #tpu.memory_space<vmem>>, vector<2x32x256xf32>,
    return
  }
  func.func @transform_0(%arg0: i32) -> (i32, i32, i32) {
    %c0_i32 = arith.constant 0 : i32
    %c0_i32_0 = arith.constant 0 : i32
    %c0_i32_1 = arith.constant 0 : i32
    return %arg0, %c0_i32, %c0_i32_0 : i32, i32, i32
  }
  func.func @transform_1(%arg0: i32) -> (i32, i32) {
    %c0_i32 = arith.constant 0 : i32
    %c0_i32_0 = arith.constant 0 : i32
    %c0_i32_1 = arith.constant 0 : i32
    return %c0_i32, %c0_i32_0 : i32, i32
  }
  func.func @transform_2(%arg0: i32) -> (i32, i32) {
    %c0_i32 = arith.constant 0 : i32
    %c0_i32_0 = arith.constant 0 : i32
    %c0_i32_1 = arith.constant 0 : i32
    return %c0_i32, %c0_i32_0 : i32, i32
  }
  func.func @transform_3(%arg0: i32) -> (i32, i32) {
    %c0_i32 = arith.constant 0 : i32
    %c0_i32_0 = arith.constant 0 : i32
    %c0_i32_1 = arith.constant 0 : i32
    return %c0_i32, %c0_i32_0 : i32, i32
  }
  func.func @transform_4(%arg0: i32) -> (i32, i32) {
    %c0_i32 = arith.constant 0 : i32
    %c0_i32_0 = arith.constant 0 : i32
    %c0_i32_1 = arith.constant 0 : i32
    return %c0_i32, %c0_i32_0 : i32, i32
  }
  func.func @transform_5(%arg0: i32) -> (i32, i32, i32) {
    %c0_i32 = arith.constant 0 : i32
    %c0_i32_0 = arith.constant 0 : i32
    %c0_i32_1 = arith.constant 0 : i32
    return %arg0, %c0_i32, %c0_i32_0 : i32, i32, i32
  }
}

</mosaic_0001>

<llo_original>
// kernel: tpu_custom_call.1
$region0: #{tpu_custom_call.1}
  #allocation0 [shape = 'u32[]', space=smem, size = 0x4, offset = 0x4, fixed_abs, tag = 'smem constant byte address 0x4 - core index']
  #allocation1 [shape = 'u32[144,128]{1,0:T(1,128)}', space=vmem, size = 0x12000, scoped, tag = 'internal scratch']
  %s0 = inlined_call_operand.hbm [shape: f32[2,64,256], index: 0, kind: input, shape index: {}]
  %s1 = inlined_call_operand.hbm [shape: bf16[256,768], index: 1, kind: input, shape index: {}]
  %s2 = inlined_call_operand.hbm [shape: bf16[256,768], index: 2, kind: input, shape index: {}]
  %s3 = inlined_call_operand.vmem [shape: f32[64,128], index: 3, kind: input, shape index: {}]
  %s4 = inlined_call_operand.vmem [shape: f32[64,1], index: 4, kind: input, shape index: {}]
  %s5 = inlined_call_operand.hbm [shape: f32[2,32,256], index: 5, kind: output, shape index: {}]
  %s6 = sld [smem:[#allocation0]]
  $region42: #{tpu_custom_call.1} parent=0
    _
  %s8 = ssub.s32 1, %s6
  %s9 = scalar_select 0, %s8, %s6
  $region1: #{tpu_custom_call.1} parent=0
    #allocation2 [shape = 'u8[131072]{0}', space=vmem, size = 0x20000, scoped, tag = 'input window, operand 0, single buffered']
    #allocation3 [shape = 's32[1]{0}', space=sflag, size = 0x4, scoped, tag = 'scoped memory for tpu_custom_call.1']
    #allocation4 [shape = 's32[1]{0}', space=sflag, size = 0x4, scoped, tag = 'scoped memory for tpu_custom_call.1']
    #allocation5 [shape = 'u8[393216]{0}', space=vmem, size = 0x60000, scoped, tag = 'input window, operand 1, single buffered']
    #allocation6 [shape = 's32[1]{0}', space=sflag, size = 0x4, scoped, tag = 'scoped memory for tpu_custom_call.1']
    #allocation7 [shape = 'u8[393216]{0}', space=vmem, size = 0x60000, scoped, tag = 'input window, operand 2, single buffered']
    #allocation8 [shape = 'u8[65536]{0}', space=vmem, size = 0x10000, scoped, tag = 'output window, operand 0, single buffered']
    %10 = vsyncpa [#allocation3], 0
    %11 = vsyncpa [#allocation6], 0
    %12 = vsyncpa [#allocation4], 0
    // Predicated region
    $region2: #{tpu_custom_call.1} parent=1 // pred_check
      _
    $region3: #{tpu_custom_call.1} parent=1 // pred_check_branch
      %14 = sbr.rel (0) target = $region5
    $region4: #{tpu_custom_call.1} parent=1 // pred_region
      %s16 = ssub.s32 4096, 4096
      %17 = vsyncadd [#allocation3], %s16
      %s18 = sshll.u32 [#allocation2], 4
      %s19 = int_to_ptr.vmem [resolvable:$true] %s18
      %24 = dma.hbm_to_vmem [thread:$0]  %s0, 4096, %s19, [#allocation3], 256, 256, 16
    $region5: #{tpu_custom_call.1} parent=1 // pred_fallthru
      _
    // Predicated region
    $region6: #{tpu_custom_call.1} parent=1 // pred_check
      _
    $region7: #{tpu_custom_call.1} parent=1 // pred_check_branch
      %26 = sbr.rel (0) target = $region9
    $region8: #{tpu_custom_call.1} parent=1 // pred_region
      %s28 = ssub.s32 12288, 12288
      %29 = vsyncadd [#allocation6], %s28
      %s30 = sshll.u32 [#allocation5], 4
      %s31 = int_to_ptr.vmem [resolvable:$true] %s30
      %36 = dma.hbm_to_vmem [thread:$0]  %s1, 12288, %s31, [#allocation6], 384, 384, 24
    $region9: #{tpu_custom_call.1} parent=1 // pred_fallthru
      _
    // Predicated region
    $region10: #{tpu_custom_call.1} parent=1 // pred_check
      _
    $region11: #{tpu_custom_call.1} parent=1 // pred_check_branch
      %38 = sbr.rel (0) target = $region13
    $region12: #{tpu_custom_call.1} parent=1 // pred_region
      %s40 = ssub.s32 12288, 12288
      %41 = vsyncadd [#allocation6], %s40
      %s42 = sshll.u32 [#allocation7], 4
      %s43 = int_to_ptr.vmem [resolvable:$true] %s42
      %48 = dma.hbm_to_vmem [thread:$0]  %s2, 12288, %s43, [#allocation6], 384, 384, 24
    $region13: #{tpu_custom_call.1} parent=1 // pred_fallthru
      _
    // Predicated region
    $region14: #{tpu_custom_call.1} parent=1 // pred_check
      _
    $region15: #{tpu_custom_call.1} parent=1 // pred_check_branch
      %50 = sbr.rel (0) target = $region17
    $region16: #{tpu_custom_call.1} parent=1 // pred_region
      _
    $region17: #{tpu_custom_call.1} parent=1 // pred_fallthru
      _
    // Predicated region
    $region18: #{tpu_custom_call.1} parent=1 // pred_check
      _
    $region19: #{tpu_custom_call.1} parent=1 // pred_check_branch
      %52 = sbr.rel (0) target = $region21
    $region20: #{tpu_custom_call.1} parent=1 // pred_region
      _
    $region21: #{tpu_custom_call.1} parent=1 // pred_fallthru
      _
    // Predicated region
    $region22: #{tpu_custom_call.1} parent=1 // pred_check
      _
    $region23: #{tpu_custom_call.1} parent=1 // pred_check_branch
      %54 = sbr.rel (0) target = $region25
    $region24: #{tpu_custom_call.1} parent=1 // pred_region
      %55 = dma.done [#allocation3], 4096
    $region25: #{tpu_custom_call.1} parent=1 // pred_fallthru
      _
    // Predicated region
    $region26: #{tpu_custom_call.1} parent=1 // pred_check
      _
    $region27: #{tpu_custom_call.1} parent=1 // pred_check_branch
      %57 = sbr.rel (0) target = $region29
    $region28: #{tpu_custom_call.1} parent=1 // pred_region
      %58 = dma.done [#allocation6], 12288
    $region29: #{tpu_custom_call.1} parent=1 // pred_fallthru
      _
    // Predicated region
    $region30: #{tpu_custom_call.1} parent=1 // pred_check
      _
    $region31: #{tpu_custom_call.1} parent=1 // pred_check_branch
      %60 = sbr.rel (0) target = $region33
    $region32: #{tpu_custom_call.1} parent=1 // pred_region
      %61 = dma.done [#allocation6], 12288
    $region33: #{tpu_custom_call.1} parent=1 // pred_fallthru
      _
    %v62 = vld [vmem:[#allocation2] sm:$0xff]
    %v63 = vld [vmem:[#allocation2 + $0x8] sm:$0xff]
    %v64 = vld [vmem:[#allocation2 + $0x10] sm:$0xff]
    %v65 = vld [vmem:[#allocation2 + $0x18] sm:$0xff]
    %v66 = vld [vmem:[#allocation2 + $0x20] sm:$0xff]
    %v67 = vld [vmem:[#allocation2 + $0x28] sm:$0xff]
    %v68 = vld [vmem:[#allocation2 + $0x30] sm:$0xff]
    %v69 = vld [vmem:[#allocation2 + $0x38] sm:$0xff]
    %v70 = vld [vmem:[#allocation2 + $0x40] sm:$0xff]
    %v71 = vld [vmem:[#allocation2 + $0x48] sm:$0xff]
    %v72 = vld [vmem:[#allocation2 + $0x50] sm:$0xff]
    %v73 = vld [vmem:[#allocation2 + $0x58] sm:$0xff]
    %v74 = vld [vmem:[#allocation2 + $0x60] sm:$0xff]
    %v75 = vld [vmem:[#allocation2 + $0x68] sm:$0xff]
    %v76 = vld [vmem:[#allocation2 + $0x70] sm:$0xff]
    %v77 = vld [vmem:[#allocation2 + $0x78] sm:$0xff]
    %v78 = vld [vmem:[#allocation2 + $0x80] sm:$0xff]
    %v79 = vld [vmem:[#allocation2 + $0x88] sm:$0xff]
    %v80 = vld [vmem:[#allocation2 + $0x90] sm:$0xff]
    %v81 = vld [vmem:[#allocation2 + $0x98] sm:$0xff]
    %v82 = vld [vmem:[#allocation2 + $0xa0] sm:$0xff]
    %v83 = vld [vmem:[#allocation2 + $0xa8] sm:$0xff]
    %v84 = vld [vmem:[#allocation2 + $0xb0] sm:$0xff]
    %v85 = vld [vmem:[#allocation2 + $0xb8] sm:$0xff]
    %v86 = vld [vmem:[#allocation2 + $0xc0] sm:$0xff]
    %v87 = vld [vmem:[#allocation2 + $0xc8] sm:$0xff]
    %v88 = vld [vmem:[#allocation2 + $0xd0] sm:$0xff]
    %v89 = vld [vmem:[#allocation2 + $0xd8] sm:$0xff]
    %v90 = vld [vmem:[#allocation2 + $0xe0] sm:$0xff]
    %v91 = vld [vmem:[#allocation2 + $0xe8] sm:$0xff]
    %v92 = vld [vmem:[#allocation2 + $0xf0] sm:$0xff]
    %v93 = vld [vmem:[#allocation2 + $0xf8] sm:$0xff]
    %v94 = vld [vmem:[#allocation5] sm:$0xff]
    %v95 = vld [vmem:[#allocation5 + $0x8] sm:$0xff]
    %v96 = vld [vmem:[#allocation5 + $0x10] sm:$0xff]
    %v97 = vld [vmem:[#allocation5 + $0x18] sm:$0xff]
    %v98 = vld [vmem:[#allocation5 + $0x20] sm:$0xff]
    %v99 = vld [vmem:[#allocation5 + $0x28] sm:$0xff]
    %v100 = vld [vmem:[#allocation5 + $0x30] sm:$0xff]
    %v101 = vld [vmem:[#allocation5 + $0x38] sm:$0xff]
    %v102 = vld [vmem:[#allocation5 + $0x40] sm:$0xff]
    %v103 = vld [vmem:[#allocation5 + $0x48] sm:$0xff]
    %v104 = vld [vmem:[#allocation5 + $0x50] sm:$0xff]
    %v105 = vld [vmem:[#allocation5 + $0x58] sm:$0xff]
    %v106 = vld [vmem:[#allocation5 + $0x60] sm:$0xff]
    %v107 = vld [vmem:[#allocation5 + $0x68] sm:$0xff]
    %v108 = vld [vmem:[#allocation5 + $0x70] sm:$0xff]
    %v109 = vld [vmem:[#allocation5 + $0x78] sm:$0xff]
    %v110 = vld [vmem:[#allocation5 + $0x80] sm:$0xff]
    %v111 = vld [vmem:[#allocation5 + $0x88] sm:$0xff]
    %v112 = vld [vmem:[#allocation5 + $0x90] sm:$0xff]
    %v113 = vld [vmem:[#allocation5 + $0x98] sm:$0xff]
    %v114 = vld [vmem:[#allocation5 + $0xa0] sm:$0xff]
    %v115 = vld [vmem:[#allocation5 + $0xa8] sm:$0xff]
    %v116 = vld [vmem:[#allocation5 + $0xb0] sm:$0xff]
    %v117 = vld [vmem:[#allocation5 + $0xb8] sm:$0xff]
    %v118 = vld [vmem:[#allocation5 + $0xc0] sm:$0xff]
    %v119 = vld [vmem:[#allocation5 + $0xc8] sm:$0xff]
    %v120 = vld [vmem:[#allocation5 + $0xd0] sm:$0xff]
    %v121 = vld [vmem:[#allocation5 + $0xd8] sm:$0xff]
    %v122 = vld [vmem:[#allocation5 + $0xe0] sm:$0xff]
    %v123 = vld [vmem:[#allocation5 + $0xe8] sm:$0xff]
    %v124 = vld [vmem:[#allocation5 + $0xf0] sm:$0xff]
    %v125 = vld [vmem:[#allocation5 + $0xf8] sm:$0xff]
    %v126 = vld [vmem:[#allocation5 + $0x100] sm:$0xff]
    %v127 = vld [vmem:[#allocation5 + $0x108] sm:$0xff]
    %v128 = vld [vmem:[#allocation5 + $0x110] sm:$0xff]
    %v129 = vld [vmem:[#allocation5 + $0x118] sm:$0xff]
    %v130 = vld [vmem:[#allocation5 + $0x120] sm:$0xff]
    %v131 = vld [vmem:[#allocation5 + $0x128] sm:$0xff]
    %v132 = vld [vmem:[#allocation5 + $0x130] sm:$0xff]
    %v133 = vld [vmem:[#allocation5 + $0x138] sm:$0xff]
    %v134 = vld [vmem:[#allocation5 + $0x140] sm:$0xff]
    %v135 = vld [vmem:[#allocation5 + $0x148] sm:$0xff]
    %v136 = vld [vmem:[#allocation5 + $0x150] sm:$0xff]
    %v137 = vld [vmem:[#allocation5 + $0x158] sm:$0xff]
    %v138 = vld [vmem:[#allocation5 + $0x160] sm:$0xff]
    %v139 = vld [vmem:[#allocation5 + $0x168] sm:$0xff]
    %v140 = vld [vmem:[#allocation5 + $0x170] sm:$0xff]
    %v141 = vld [vmem:[#allocation5 + $0x178] sm:$0xff]
    %v142 = vld [vmem:[#allocation5 + $0x180] sm:$0xff]
    %v143 = vld [vmem:[#allocation5 + $0x188] sm:$0xff]
    %v144 = vld [vmem:[#allocation5 + $0x190] sm:$0xff]
    %v145 = vld [vmem:[#allocation5 + $0x198] sm:$0xff]
    %v146 = vld [vmem:[#allocation5 + $0x1a0] sm:$0xff]
    %v147 = vld [vmem:[#allocation5 + $0x1a8] sm:$0xff]
    %v148 = vld [vmem:[#allocation5 + $0x1b0] sm:$0xff]
    %v149 = vld [vmem:[#allocation5 + $0x1b8] sm:$0xff]
    %v150 = vld [vmem:[#allocation5 + $0x1c0] sm:$0xff]
    %v151 = vld [vmem:[#allocation5 + $0x1c8] sm:$0xff]
    %v152 = vld [vmem:[#allocation5 + $0x1d0] sm:$0xff]
    %v153 = vld [vmem:[#allocation5 + $0x1d8] sm:$0xff]
    %v154 = vld [vmem:[#allocation5 + $0x1e0] sm:$0xff]
    %v155 = vld [vmem:[#allocation5 + $0x1e8] sm:$0xff]
    %v156 = vld [vmem:[#allocation5 + $0x1f0] sm:$0xff]
    %v157 = vld [vmem:[#allocation5 + $0x1f8] sm:$0xff]
    %v158 = vld [vmem:[#allocation5 + $0x200] sm:$0xff]
    %v159 = vld [vmem:[#allocation5 + $0x208] sm:$0xff]
    %v160 = vld [vmem:[#allocation5 + $0x210] sm:$0xff]
    %v161 = vld [vmem:[#allocation5 + $0x218] sm:$0xff]
    %v162 = vld [vmem:[#allocation5 + $0x220] sm:$0xff]
    %v163 = vld [vmem:[#allocation5 + $0x228] sm:$0xff]
    %v164 = vld [vmem:[#allocation5 + $0x230] sm:$0xff]
    %v165 = vld [vmem:[#allocation5 + $0x238] sm:$0xff]
    %v166 = vld [vmem:[#allocation5 + $0x240] sm:$0xff]
    %v167 = vld [vmem:[#allocation5 + $0x248] sm:$0xff]
    %v168 = vld [vmem:[#allocation5 + $0x250] sm:$0xff]
    %v169 = vld [vmem:[#allocation5 + $0x258] sm:$0xff]
    %v170 = vld [vmem:[#allocation5 + $0x260] sm:$0xff]
    %v171 = vld [vmem:[#allocation5 + $0x268] sm:$0xff]
    %v172 = vld [vmem:[#allocation5 + $0x270] sm:$0xff]
    %v173 = vld [vmem:[#allocation5 + $0x278] sm:$0xff]
    %v174 = vld [vmem:[#allocation5 + $0x280] sm:$0xff]
    %v175 = vld [vmem:[#allocation5 + $0x288] sm:$0xff]
    %v176 = vld [vmem:[#allocation5 + $0x290] sm:$0xff]
    %v177 = vld [vmem:[#allocation5 + $0x298] sm:$0xff]
    %v178 = vld [vmem:[#allocation5 + $0x2a0] sm:$0xff]
    %v179 = vld [vmem:[#allocation5 + $0x2a8] sm:$0xff]
    %v180 = vld [vmem:[#allocation5 + $0x2b0] sm:$0xff]
    %v181 = vld [vmem:[#allocation5 + $0x2b8] sm:$0xff]
    %v182 = vld [vmem:[#allocation5 + $0x2c0] sm:$0xff]
    %v183 = vld [vmem:[#allocation5 + $0x2c8] sm:$0xff]
    %v184 = vld [vmem:[#allocation5 + $0x2d0] sm:$0xff]
    %v185 = vld [vmem:[#allocation5 + $0x2d8] sm:$0xff]
    %v186 = vld [vmem:[#allocation5 + $0x2e0] sm:$0xff]
    %v187 = vld [vmem:[#allocation5 + $0x2e8] sm:$0xff]
    %v188 = vld [vmem:[#allocation5 + $0x2f0] sm:$0xff]
    %v189 = vld [vmem:[#allocation5 + $0x2f8] sm:$0xff]
    %v190 = vpack.c.bf16 %v64, %v62
    %v191 = vpack.c.bf16 %v65, %v63
    %v192 = vpack.c.bf16 %v68, %v66
    %v193 = vpack.c.bf16 %v69, %v67
    %v194 = vpack.c.bf16 %v72, %v70
    %v195 = vpack.c.bf16 %v73, %v71
    %v196 = vpack.c.bf16 %v76, %v74
    %v197 = vpack.c.bf16 %v77, %v75
    %v198 = vpack.c.bf16 %v80, %v78
    %v199 = vpack.c.bf16 %v81, %v79
    %v200 = vpack.c.bf16 %v84, %v82
    %v201 = vpack.c.bf16 %v85, %v83
    %v202 = vpack.c.bf16 %v88, %v86
    %v203 = vpack.c.bf16 %v89, %v87
    %v204 = vpack.c.bf16 %v92, %v90
    %v205 = vpack.c.bf16 %v93, %v91
    %v206 = vunpack.c.l.bf16 %v190
    %v207 = vunpack.c.l.bf16 %v191
    %v208 = vunpack.c.h.bf16 %v190
    %v209 = vunpack.c.h.bf16 %v191
    %v210 = vunpack.c.l.bf16 %v192
    %v211 = vunpack.c.l.bf16 %v193
    %v212 = vunpack.c.h.bf16 %v192
    %v213 = vunpack.c.h.bf16 %v193
    %v214 = vunpack.c.l.bf16 %v194
    %v215 = vunpack.c.l.bf16 %v195
    %v216 = vunpack.c.h.bf16 %v194
    %v217 = vunpack.c.h.bf16 %v195
    %v218 = vunpack.c.l.bf16 %v196
    %v219 = vunpack.c.l.bf16 %v197
    %v220 = vunpack.c.h.bf16 %v196
    %v221 = vunpack.c.h.bf16 %v197
    %v222 = vunpack.c.l.bf16 %v198
    %v223 = vunpack.c.l.bf16 %v199
    %v224 = vunpack.c.h.bf16 %v198
    %v225 = vunpack.c.h.bf16 %v199
    %v226 = vunpack.c.l.bf16 %v200
    %v227 = vunpack.c.l.bf16 %v201
    %v228 = vunpack.c.h.bf16 %v200
    %v229 = vunpack.c.h.bf16 %v201
    %v230 = vunpack.c.l.bf16 %v202
    %v231 = vunpack.c.l.bf16 %v203
    %v232 = vunpack.c.h.bf16 %v202
    %v233 = vunpack.c.h.bf16 %v203
    %v234 = vunpack.c.l.bf16 %v204
    %v235 = vunpack.c.l.bf16 %v205
    %v236 = vunpack.c.h.bf16 %v204
    %v237 = vunpack.c.h.bf16 %v205
    %v238 = vsub.f32 %v62, %v206
    %v239 = vsub.f32 %v63, %v207
    %v240 = vsub.f32 %v64, %v208
    %v241 = vsub.f32 %v65, %v209
    %v242 = vsub.f32 %v66, %v210
    %v243 = vsub.f32 %v67, %v211
    %v244 = vsub.f32 %v68, %v212
    %v245 = vsub.f32 %v69, %v213
    %v246 = vsub.f32 %v70, %v214
    %v247 = vsub.f32 %v71, %v215
    %v248 = vsub.f32 %v72, %v216
    %v249 = vsub.f32 %v73, %v217
    %v250 = vsub.f32 %v74, %v218
    %v251 = vsub.f32 %v75, %v219
    %v252 = vsub.f32 %v76, %v220
    %v253 = vsub.f32 %v77, %v221
    %v254 = vsub.f32 %v78, %v222
    %v255 = vsub.f32 %v79, %v223
    %v256 = vsub.f32 %v80, %v224
    %v257 = vsub.f32 %v81, %v225
    %v258 = vsub.f32 %v82, %v226
    %v259 = vsub.f32 %v83, %v227
    %v260 = vsub.f32 %v84, %v228
    %v261 = vsub.f32 %v85, %v229
    %v262 = vsub.f32 %v86, %v230
    %v263 = vsub.f32 %v87, %v231
    %v264 = vsub.f32 %v88, %v232
    %v265 = vsub.f32 %v89, %v233
    %v266 = vsub.f32 %v90, %v234
    %v267 = vsub.f32 %v91, %v235
    %v268 = vsub.f32 %v92, %v236
    %v269 = vsub.f32 %v93, %v237
    %v270 = vpack.c.bf16 %v240, %v238
    %v271 = vpack.c.bf16 %v241, %v239
    %v272 = vpack.c.bf16 %v244, %v242
    %v273 = vpack.c.bf16 %v245, %v243
    %v274 = vpack.c.bf16 %v248, %v246
    %v275 = vpack.c.bf16 %v249, %v247
    %v276 = vpack.c.bf16 %v252, %v250
    %v277 = vpack.c.bf16 %v253, %v251
    %v278 = vpack.c.bf16 %v256, %v254
    %v279 = vpack.c.bf16 %v257, %v255
    %v280 = vpack.c.bf16 %v260, %v258
    %v281 = vpack.c.bf16 %v261, %v259
    %v282 = vpack.c.bf16 %v264, %v262
    %v283 = vpack.c.bf16 %v265, %v263
    %v284 = vpack.c.bf16 %v268, %v266
    %v285 = vpack.c.bf16 %v269, %v267
    %v382 = vunpack.c.l.b16 %v94
    %v383 = vunpack.c.h.b16 %v94
    %v384 = vunpack.c.l.b16 %v95
    %v385 = vunpack.c.h.b16 %v95
    %v386 = vunpack.c.l.b16 %v96
    %v387 = vunpack.c.h.b16 %v96
    %v388 = vunpack.c.l.b16 %v97
    %v389 = vunpack.c.h.b16 %v97
    %v390 = vunpack.c.l.b16 %v98
    %v391 = vunpack.c.h.b16 %v98
    %v392 = vunpack.c.l.b16 %v99
    %v393 = vunpack.c.h.b16 %v99
    %v394 = vunpack.c.l.b16 %v100
    %v395 = vunpack.c.h.b16 %v100
    %v396 = vunpack.c.l.b16 %v101
    %v397 = vunpack.c.h.b16 %v101
    %v398 = vunpack.c.l.b16 %v102
    %v399 = vunpack.c.h.b16 %v102
    %v400 = vunpack.c.l.b16 %v103
    %v401 = vunpack.c.h.b16 %v103
    %v402 = vunpack.c.l.b16 %v104
    %v403 = vunpack.c.h.b16 %v104
    %v404 = vunpack.c.l.b16 %v105
    %v405 = vunpack.c.h.b16 %v105
    %v406 = vunpack.c.l.b16 %v106
    %v407 = vunpack.c.h.b16 %v106
    %v408 = vunpack.c.l.b16 %v107
    %v409 = vunpack.c.h.b16 %v107
    %v410 = vunpack.c.l.b16 %v108
    %v411 = vunpack.c.h.b16 %v108
    %v412 = vunpack.c.l.b16 %v109
    %v413 = vunpack.c.h.b16 %v109
    %v414 = vunpack.c.l.b16 %v110
    %v415 = vunpack.c.h.b16 %v110
    %v416 = vunpack.c.l.b16 %v111
    %v417 = vunpack.c.h.b16 %v111
    %v418 = vunpack.c.l.b16 %v112
    %v419 = vunpack.c.h.b16 %v112
    %v420 = vunpack.c.l.b16 %v113
    %v421 = vunpack.c.h.b16 %v113
    %v422 = vunpack.c.l.b16 %v114
    %v423 = vunpack.c.h.b16 %v114
    %v424 = vunpack.c.l.b16 %v115
    %v425 = vunpack.c.h.b16 %v115
    %v426 = vunpack.c.l.b16 %v116
    %v427 = vunpack.c.h.b16 %v116
    %v428 = vunpack.c.l.b16 %v117
    %v429 = vunpack.c.h.b16 %v117
    %v430 = vunpack.c.l.b16 %v118
    %v431 = vunpack.c.h.b16 %v118
    %v432 = vunpack.c.l.b16 %v119
    %v433 = vunpack.c.h.b16 %v119
    %v434 = vunpack.c.l.b16 %v120
    %v435 = vunpack.c.h.b16 %v120
    %v436 = vunpack.c.l.b16 %v121
    %v437 = vunpack.c.h.b16 %v121
    %v438 = vunpack.c.l.b16 %v122
    %v439 = vunpack.c.h.b16 %v122
    %v440 = vunpack.c.l.b16 %v123
    %v441 = vunpack.c.h.b16 %v123
    %v442 = vunpack.c.l.b16 %v124
    %v443 = vunpack.c.h.b16 %v124
    %v444 = vunpack.c.l.b16 %v125
    %v445 = vunpack.c.h.b16 %v125
    %v446 = vunpack.c.l.b16 %v126
    %v447 = vunpack.c.h.b16 %v126
    %v448 = vunpack.c.l.b16 %v127
    %v449 = vunpack.c.h.b16 %v127
    %v450 = vunpack.c.l.b16 %v128
    %v451 = vunpack.c.h.b16 %v128
    %v452 = vunpack.c.l.b16 %v129
    %v453 = vunpack.c.h.b16 %v129
    %v454 = vunpack.c.l.b16 %v130
    %v455 = vunpack.c.h.b16 %v130
    %v456 = vunpack.c.l.b16 %v131
    %v457 = vunpack.c.h.b16 %v131
    %v458 = vunpack.c.l.b16 %v132
    %v459 = vunpack.c.h.b16 %v132
    %v460 = vunpack.c.l.b16 %v133
    %v461 = vunpack.c.h.b16 %v133
    %v462 = vunpack.c.l.b16 %v134
    %v463 = vunpack.c.h.b16 %v134
    %v464 = vunpack.c.l.b16 %v135
    %v465 = vunpack.c.h.b16 %v135
    %v466 = vunpack.c.l.b16 %v136
    %v467 = vunpack.c.h.b16 %v136
    %v468 = vunpack.c.l.b16 %v137
    %v469 = vunpack.c.h.b16 %v137
    %v470 = vunpack.c.l.b16 %v138
    %v471 = vunpack.c.h.b16 %v138
    %v472 = vunpack.c.l.b16 %v139
    %v473 = vunpack.c.h.b16 %v139
    %v474 = vunpack.c.l.b16 %v140
    %v475 = vunpack.c.h.b16 %v140
    %v476 = vunpack.c.l.b16 %v141
    %v477 = vunpack.c.h.b16 %v141
    %v478 = vunpack.c.l.b16 %v142
    %v479 = vunpack.c.h.b16 %v142
    %v480 = vunpack.c.l.b16 %v143
    %v481 = vunpack.c.h.b16 %v143
    %v482 = vunpack.c.l.b16 %v144
    %v483 = vunpack.c.h.b16 %v144
    %v484 = vunpack.c.l.b16 %v145
    %v485 = vunpack.c.h.b16 %v145
    %v486 = vunpack.c.l.b16 %v146
    %v487 = vunpack.c.h.b16 %v146
    %v488 = vunpack.c.l.b16 %v147
    %v489 = vunpack.c.h.b16 %v147
    %v490 = vunpack.c.l.b16 %v148
    %v491 = vunpack.c.h.b16 %v148
    %v492 = vunpack.c.l.b16 %v149
    %v493 = vunpack.c.h.b16 %v149
    %v494 = vunpack.c.l.b16 %v150
    %v495 = vunpack.c.h.b16 %v150
    %v496 = vunpack.c.l.b16 %v151
    %v497 = vunpack.c.h.b16 %v151
    %v498 = vunpack.c.l.b16 %v152
    %v499 = vunpack.c.h.b16 %v152
    %v500 = vunpack.c.l.b16 %v153
    %v501 = vunpack.c.h.b16 %v153
    %v502 = vunpack.c.l.b16 %v154
    %v503 = vunpack.c.h.b16 %v154
    %v504 = vunpack.c.l.b16 %v155
    %v505 = vunpack.c.h.b16 %v155
    %v506 = vunpack.c.l.b16 %v156
    %v507 = vunpack.c.h.b16 %v156
    %v508 = vunpack.c.l.b16 %v157
    %v509 = vunpack.c.h.b16 %v157
    %v510 = vunpack.c.l.b16 %v158
    %v511 = vunpack.c.h.b16 %v158
    %v512 = vunpack.c.l.b16 %v159
    %v513 = vunpack.c.h.b16 %v159
    %v514 = vunpack.c.l.b16 %v160
    %v515 = vunpack.c.h.b16 %v160
    %v516 = vunpack.c.l.b16 %v161
    %v517 = vunpack.c.h.b16 %v161
    %v518 = vunpack.c.l.b16 %v162
    %v519 = vunpack.c.h.b16 %v162
    %v520 = vunpack.c.l.b16 %v163
    %v521 = vunpack.c.h.b16 %v163
    %v522 = vunpack.c.l.b16 %v164
    %v523 = vunpack.c.h.b16 %v164
    %v524 = vunpack.c.l.b16 %v165
    %v525 = vunpack.c.h.b16 %v165
    %v526 = vunpack.c.l.b16 %v166
    %v527 = vunpack.c.h.b16 %v166
    %v528 = vunpack.c.l.b16 %v167
    %v529 = vunpack.c.h.b16 %v167
    %v530 = vunpack.c.l.b16 %v168
    %v531 = vunpack.c.h.b16 %v168
    %v532 = vunpack.c.l.b16 %v169
    %v533 = vunpack.c.h.b16 %v169
    %v534 = vunpack.c.l.b16 %v170
    %v535 = vunpack.c.h.b16 %v170
    %v536 = vunpack.c.l.b16 %v171
    %v537 = vunpack.c.h.b16 %v171
    %v538 = vunpack.c.l.b16 %v172
    %v539 = vunpack.c.h.b16 %v172
    %v540 = vunpack.c.l.b16 %v173
    %v541 = vunpack.c.h.b16 %v173
    %v542 = vunpack.c.l.b16 %v174
    %v543 = vunpack.c.h.b16 %v174
    %v544 = vunpack.c.l.b16 %v175
    %v545 = vunpack.c.h.b16 %v175
    %v546 = vunpack.c.l.b16 %v176
    %v547 = vunpack.c.h.b16 %v176
    %v548 = vunpack.c.l.b16 %v177
    %v549 = vunpack.c.h.b16 %v177
    %v550 = vunpack.c.l.b16 %v178
    %v551 = vunpack.c.h.b16 %v178
    %v552 = vunpack.c.l.b16 %v179
    %v553 = vunpack.c.h.b16 %v179
    %v554 = vunpack.c.l.b16 %v180
    %v555 = vunpack.c.h.b16 %v180
    %v556 = vunpack.c.l.b16 %v181
    %v557 = vunpack.c.h.b16 %v181
    %v558 = vunpack.c.l.b16 %v182
    %v559 = vunpack.c.h.b16 %v182
    %v560 = vunpack.c.l.b16 %v183
    %v561 = vunpack.c.h.b16 %v183
    %v562 = vunpack.c.l.b16 %v184
    %v563 = vunpack.c.h.b16 %v184
    %v564 = vunpack.c.l.b16 %v185
    %v565 = vunpack.c.h.b16 %v185
    %v566 = vunpack.c.l.b16 %v186
    %v567 = vunpack.c.h.b16 %v186
    %v568 = vunpack.c.l.b16 %v187
    %v569 = vunpack.c.h.b16 %v187
    %v570 = vunpack.c.l.b16 %v188
    %v571 = vunpack.c.h.b16 %v188
    %v572 = vunpack.c.l.b16 %v189
    %v573 = vunpack.c.h.b16 %v189
    %v574 = vpack.c.b16 %v388, %v382
    %v575 = vpack.c.b16 %v389, %v383
    %v576 = vpack.c.b16 %v390, %v384
    %v577 = vpack.c.b16 %v391, %v385
    %v578 = vpack.c.b16 %v392, %v386
    %v579 = vpack.c.b16 %v393, %v387
    %v580 = vpack.c.b16 %v400, %v394
    %v581 = vpack.c.b16 %v401, %v395
    %v582 = vpack.c.b16 %v402, %v396
    %v583 = vpack.c.b16 %v403, %v397
    %v584 = vpack.c.b16 %v404, %v398
    %v585 = vpack.c.b16 %v405, %v399
    %v586 = vpack.c.b16 %v412, %v406
    %v587 = vpack.c.b16 %v413, %v407
    %v588 = vpack.c.b16 %v414, %v408
    %v589 = vpack.c.b16 %v415, %v409
    %v590 = vpack.c.b16 %v416, %v410
    %v591 = vpack.c.b16 %v417, %v411
    %v592 = vpack.c.b16 %v424, %v418
    %v593 = vpack.c.b16 %v425, %v419
    %v594 = vpack.c.b16 %v426, %v420
    %v595 = vpack.c.b16 %v427, %v421
    %v596 = vpack.c.b16 %v428, %v422
    %v597 = vpack.c.b16 %v429, %v423
    %v598 = vpack.c.b16 %v436, %v430
    %v599 = vpack.c.b16 %v437, %v431
    %v600 = vpack.c.b16 %v438, %v432
    %v601 = vpack.c.b16 %v439, %v433
    %v602 = vpack.c.b16 %v440, %v434
    %v603 = vpack.c.b16 %v441, %v435
    %v604 = vpack.c.b16 %v448, %v442
    %v605 = vpack.c.b16 %v449, %v443
    %v606 = vpack.c.b16 %v450, %v444
    %v607 = vpack.c.b16 %v451, %v445
    %v608 = vpack.c.b16 %v452, %v446
    %v609 = vpack.c.b16 %v453, %v447
    %v610 = vpack.c.b16 %v460, %v454
    %v611 = vpack.c.b16 %v461, %v455
    %v612 = vpack.c.b16 %v462, %v456
    %v613 = vpack.c.b16 %v463, %v457
    %v614 = vpack.c.b16 %v464, %v458
    %v615 = vpack.c.b16 %v465, %v459
    %v616 = vpack.c.b16 %v472, %v466
    %v617 = vpack.c.b16 %v473, %v467
    %v618 = vpack.c.b16 %v474, %v468
    %v619 = vpack.c.b16 %v475, %v469
    %v620 = vpack.c.b16 %v476, %v470
    %v621 = vpack.c.b16 %v477, %v471
    %v622 = vpack.c.b16 %v484, %v478
    %v623 = vpack.c.b16 %v485, %v479
    %v624 = vpack.c.b16 %v486, %v480
    %v625 = vpack.c.b16 %v487, %v481
    %v626 = vpack.c.b16 %v488, %v482
    %v627 = vpack.c.b16 %v489, %v483
    %v628 = vpack.c.b16 %v496, %v490
    %v629 = vpack.c.b16 %v497, %v491
    %v630 = vpack.c.b16 %v498, %v492
    %v631 = vpack.c.b16 %v499, %v493
    %v632 = vpack.c.b16 %v500, %v494
    %v633 = vpack.c.b16 %v501, %v495
    %v634 = vpack.c.b16 %v508, %v502
    %v635 = vpack.c.b16 %v509, %v503
    %v636 = vpack.c.b16 %v510, %v504
    %v637 = vpack.c.b16 %v511, %v505
    %v638 = vpack.c.b16 %v512, %v506
    %v639 = vpack.c.b16 %v513, %v507
    %v640 = vpack.c.b16 %v520, %v514
    %v641 = vpack.c.b16 %v521, %v515
    %v642 = vpack.c.b16 %v522, %v516
    %v643 = vpack.c.b16 %v523, %v517
    %v644 = vpack.c.b16 %v524, %v518
    %v645 = vpack.c.b16 %v525, %v519
    %v646 = vpack.c.b16 %v532, %v526
    %v647 = vpack.c.b16 %v533, %v527
    %v648 = vpack.c.b16 %v534, %v528
    %v649 = vpack.c.b16 %v535, %v529
    %v650 = vpack.c.b16 %v536, %v530
    %v651 = vpack.c.b16 %v537, %v531
    %v652 = vpack.c.b16 %v544, %v538
    %v653 = vpack.c.b16 %v545, %v539
    %v654 = vpack.c.b16 %v546, %v540
    %v655 = vpack.c.b16 %v547, %v541
    %v656 = vpack.c.b16 %v548, %v542
    %v657 = vpack.c.b16 %v549, %v543
    %v658 = vpack.c.b16 %v556, %v550
    %v659 = vpack.c.b16 %v557, %v551
    %v660 = vpack.c.b16 %v558, %v552
    %v661 = vpack.c.b16 %v559, %v553
    %v662 = vpack.c.b16 %v560, %v554
    %v663 = vpack.c.b16 %v561, %v555
    %v664 = vpack.c.b16 %v568, %v562
    %v665 = vpack.c.b16 %v569, %v563
    %v666 = vpack.c.b16 %v570, %v564
    %v667 = vpack.c.b16 %v571, %v565
    %v668 = vpack.c.b16 %v572, %v566
    %v669 = vpack.c.b16 %v573, %v567
    %766 = vmatprep.subr.bf16.mxu0 %v617
    %767 = vmatpush1.bf16.msra.mxu0 %v616
    %768 = vmatprep.subr.bf16.mxu0 %v611
    %769 = vmatpush1.bf16.msra.mxu0 %v610
    %770 = vmatprep.subr.bf16.mxu0 %v605
    %771 = vmatpush1.bf16.msra.mxu0 %v604
    %772 = vmatprep.subr.bf16.mxu0 %v599
    %773 = vmatpush1.bf16.msra.mxu0 %v598
    %774 = vmatprep.subr.bf16.mxu0 %v593
    %775 = vmatpush1.bf16.msra.mxu0 %v592
    %776 = vmatprep.subr.bf16.mxu0 %v587
    %777 = vmatpush1.bf16.msra.mxu0 %v586
    %778 = vmatprep.subr.bf16.mxu0 %v581
    %779 = vmatpush1.bf16.msra.mxu0 %v580
    %780 = vmatprep.subr.bf16.mxu0 %v575
    %781 = vmatpush1.bf16.msra.mxu0 %v574
    %782 = vmatprep.subr.bf16.mxu0 %v665
    %783 = vmatpush2.bf16.msra.mxu0 %v664
    %784 = vmatprep.subr.bf16.mxu0 %v659
    %785 = vmatpush2.bf16.msra.mxu0 %v658
    %786 = vmatprep.subr.bf16.mxu0 %v653
    %787 = vmatpush2.bf16.msra.mxu0 %v652
    %788 = vmatprep.subr.bf16.mxu0 %v647
    %789 = vmatpush2.bf16.msra.mxu0 %v646
    %790 = vmatprep.subr.bf16.mxu0 %v641
    %791 = vmatpush2.bf16.msra.mxu0 %v640
    %792 = vmatprep.subr.bf16.mxu0 %v635
    %793 = vmatpush2.bf16.msra.mxu0 %v634
    %794 = vmatprep.subr.bf16.mxu0 %v629
    %795 = vmatpush2.bf16.msra.mxu0 %v628
    %796 = vmatprep.subr.bf16.mxu0 %v623
    %797 = vmatpush2.bf16.msra.mxu0 %v622
    %798 = vmatprep.mubr.bf16.mxu0 %v191
    %799 = vmatmul.mubr.bf16.gmra.mxu0 %v190
    %v800 = vpop.f32.mrf.mxu0
    %v801 = vadd.f32 0.0, %v800
    %v802 = vpop.f32.mrf.mxu0
    %v803 = vadd.f32 0.0, %v802
    %v804 = vpop.f32.mrf.mxu0
    %v805 = vadd.f32 0.0, %v804
    %v806 = vpop.f32.mrf.mxu0
    %v807 = vadd.f32 0.0, %v806
    %808 = vmatprep.mubr.bf16.mxu0 %v193
    %809 = vmatmul.mubr.bf16.gmra.mxu0 %v192
    %v810 = vpop.f32.mrf.mxu0
    %v811 = vadd.f32 0.0, %v810
    %v812 = vpop.f32.mrf.mxu0
    %v813 = vadd.f32 0.0, %v812
    %v814 = vpop.f32.mrf.mxu0
    %v815 = vadd.f32 0.0, %v814
    %v816 = vpop.f32.mrf.mxu0
    %v817 = vadd.f32 0.0, %v816
    %818 = vmatprep.mubr.bf16.mxu0 %v195
    %819 = vmatmul.mubr.bf16.gmra.mxu0 %v194
    %v820 = vpop.f32.mrf.mxu0
    %v821 = vadd.f32 0.0, %v820
    %v822 = vpop.f32.mrf.mxu0
    %v823 = vadd.f32 0.0, %v822
    %v824 = vpop.f32.mrf.mxu0
    %v825 = vadd.f32 0.0, %v824
    %v826 = vpop.f32.mrf.mxu0
    %v827 = vadd.f32 0.0, %v826
    %828 = vmatprep.mubr.bf16.mxu0 %v197
    %829 = vmatmul.mubr.bf16.gmra.mxu0 %v196
    %v830 = vpop.f32.mrf.mxu0
    %v831 = vadd.f32 0.0, %v830
    %v832 = vpop.f32.mrf.mxu0
    %v833 = vadd.f32 0.0, %v832
    %v834 = vpop.f32.mrf.mxu0
    %v835 = vadd.f32 0.0, %v834
    %v836 = vpop.f32.mrf.mxu0
    %v837 = vadd.f32 0.0, %v836
    %838 = vmatprep.mubr.bf16.mxu0 %v199
    %839 = vmatmul.mubr.bf16.gmra.mxu0 %v198
    %v840 = vpop.f32.mrf.mxu0
    %v841 = vadd.f32 0.0, %v840
    %v842 = vpop.f32.mrf.mxu0
    %v843 = vadd.f32 0.0, %v842
    %v844 = vpop.f32.mrf.mxu0
    %v845 = vadd.f32 0.0, %v844
    %v846 = vpop.f32.mrf.mxu0
    %v847 = vadd.f32 0.0, %v846
    %848 = vmatprep.mubr.bf16.mxu0 %v201
    %849 = vmatmul.mubr.bf16.gmra.mxu0 %v200
    %v850 = vpop.f32.mrf.mxu0
    %v851 = vadd.f32 0.0, %v850
    %v852 = vpop.f32.mrf.mxu0
    %v853 = vadd.f32 0.0, %v852
    %v854 = vpop.f32.mrf.mxu0
    %v855 = vadd.f32 0.0, %v854
    %v856 = vpop.f32.mrf.mxu0
    %v857 = vadd.f32 0.0, %v856
    %858 = vmatprep.mubr.bf16.mxu0 %v203
    %859 = vmatmul.mubr.bf16.gmra.mxu0 %v202
    %v860 = vpop.f32.mrf.mxu0
    %v861 = vadd.f32 0.0, %v860
    %v862 = vpop.f32.mrf.mxu0
    %v863 = vadd.f32 0.0, %v862
    %v864 = vpop.f32.mrf.mxu0
    %v865 = vadd.f32 0.0, %v864
    %v866 = vpop.f32.mrf.mxu0
    %v867 = vadd.f32 0.0, %v866
    %868 = vmatprep.mubr.bf16.mxu0 %v205
    %869 = vmatmul.mubr.bf16.gmra.mxu0 %v204
    %v870 = vpop.f32.mrf.mxu0
    %v871 = vadd.f32 0.0, %v870
    %v872 = vpop.f32.mrf.mxu0
    %v873 = vadd.f32 0.0, %v872
    %v874 = vpop.f32.mrf.mxu0
    %v875 = vadd.f32 0.0, %v874
    %v876 = vpop.f32.mrf.mxu0
    %v877 = vadd.f32 0.0, %v876
    %878 = vmatprep.mubr.bf16.mxu0 %v271
    %879 = vmatmul.mubr.bf16.gmra.mxu0 %v270
    %v880 = vpop.f32.mrf.mxu0
    %v881 = vadd.f32 0.0, %v880
    %v882 = vpop.f32.mrf.mxu0
    %v883 = vadd.f32 0.0, %v882
    %v884 = vpop.f32.mrf.mxu0
    %v885 = vadd.f32 0.0, %v884
    %v886 = vpop.f32.mrf.mxu0
    %v887 = vadd.f32 0.0, %v886
    %888 = vmatprep.mubr.bf16.mxu0 %v273
    %889 = vmatmul.mubr.bf16.gmra.mxu0 %v272
    %v890 = vpop.f32.mrf.mxu0
    %v891 = vadd.f32 0.0, %v890
    %v892 = vpop.f32.mrf.mxu0
    %v893 = vadd.f32 0.0, %v892
    %v894 = vpop.f32.mrf.mxu0
    %v895 = vadd.f32 0.0, %v894
    %v896 = vpop.f32.mrf.mxu0
    %v897 = vadd.f32 0.0, %v896
    %898 = vmatprep.mubr.bf16.mxu0 %v275
    %899 = vmatmul.mubr.bf16.gmra.mxu0 %v274
    %v900 = vpop.f32.mrf.mxu0
    %v901 = vadd.f32 0.0, %v900
    %v902 = vpop.f32.mrf.mxu0
    %v903 = vadd.f32 0.0, %v902
    %v904 = vpop.f32.mrf.mxu0
    %v905 = vadd.f32 0.0, %v904
    %v906 = vpop.f32.mrf.mxu0
    %v907 = vadd.f32 0.0, %v906
    %908 = vmatprep.mubr.bf16.mxu0 %v277
    %909 = vmatmul.mubr.bf16.gmra.mxu0 %v276
    %v910 = vpop.f32.mrf.mxu0
    %v911 = vadd.f32 0.0, %v910
    %v912 = vpop.f32.mrf.mxu0
    %v913 = vadd.f32 0.0, %v912
    %v914 = vpop.f32.mrf.mxu0
    %v915 = vadd.f32 0.0, %v914
    %v916 = vpop.f32.mrf.mxu0
    %v917 = vadd.f32 0.0, %v916
    %918 = vmatprep.mubr.bf16.mxu0 %v279
    %919 = vmatmul.mubr.bf16.gmra.mxu0 %v278
    %v920 = vpop.f32.mrf.mxu0
    %v921 = vadd.f32 0.0, %v920
    %v922 = vpop.f32.mrf.mxu0
    %v923 = vadd.f32 0.0, %v922
    %v924 = vpop.f32.mrf.mxu0
    %v925 = vadd.f32 0.0, %v924
    %v926 = vpop.f32.mrf.mxu0
    %v927 = vadd.f32 0.0, %v926
    %928 = vmatprep.mubr.bf16.mxu0 %v281
    %929 = vmatmul.mubr.bf16.gmra.mxu0 %v280
    %v930 = vpop.f32.mrf.mxu0
    %v931 = vadd.f32 0.0, %v930
    %v932 = vpop.f32.mrf.mxu0
    %v933 = vadd.f32 0.0, %v932
    %v934 = vpop.f32.mrf.mxu0
    %v935 = vadd.f32 0.0, %v934
    %v936 = vpop.f32.mrf.mxu0
    %v937 = vadd.f32 0.0, %v936
    %938 = vmatprep.mubr.bf16.mxu0 %v283
    %939 = vmatmul.mubr.bf16.gmra.mxu0 %v282
    %v940 = vpop.f32.mrf.mxu0
    %v941 = vadd.f32 0.0, %v940
    %v942 = vpop.f32.mrf.mxu0
    %v943 = vadd.f32 0.0, %v942
    %v944 = vpop.f32.mrf.mxu0
    %v945 = vadd.f32 0.0, %v944
    %v946 = vpop.f32.mrf.mxu0
    %v947 = vadd.f32 0.0, %v946
    %948 = vmatprep.mubr.bf16.mxu0 %v285
    %949 = vmatmul.mubr.bf16.gmra.mxu0 %v284
    %v950 = vpop.f32.mrf.mxu0
    %v951 = vadd.f32 0.0, %v950
    %v952 = vpop.f32.mrf.mxu0
    %v953 = vadd.f32 0.0, %v952
    %v954 = vpop.f32.mrf.mxu0
    %v955 = vadd.f32 0.0, %v954
    %v956 = vpop.f32.mrf.mxu0
    %v957 = vadd.f32 0.0, %v956
    %958 = vdwg.mxu0
    %959 = vmatprep.subr.bf16.mxu0 %v619
    %960 = vmatpush1.bf16.msra.mxu0 %v618
    %961 = vmatprep.subr.bf16.mxu0 %v613
    %962 = vmatpush1.bf16.msra.mxu0 %v612
    %963 = vmatprep.subr.bf16.mxu0 %v607
    %964 = vmatpush1.bf16.msra.mxu0 %v606
    %965 = vmatprep.subr.bf16.mxu0 %v601
    %966 = vmatpush1.bf16.msra.mxu0 %v600
    %967 = vmatprep.subr.bf16.mxu0 %v595
    %968 = vmatpush1.bf16.msra.mxu0 %v594
    %969 = vmatprep.subr.bf16.mxu0 %v589
    %970 = vmatpush1.bf16.msra.mxu0 %v588
    %971 = vmatprep.subr.bf16.mxu0 %v583
    %972 = vmatpush1.bf16.msra.mxu0 %v582
    %973 = vmatprep.subr.bf16.mxu0 %v577
    %974 = vmatpush1.bf16.msra.mxu0 %v576
    %975 = vmatprep.subr.bf16.mxu0 %v667
    %976 = vmatpush2.bf16.msra.mxu0 %v666
    %977 = vmatprep.subr.bf16.mxu0 %v661
    %978 = vmatpush2.bf16.msra.mxu0 %v660
    %979 = vmatprep.subr.bf16.mxu0 %v655
    %980 = vmatpush2.bf16.msra.mxu0 %v654
    %981 = vmatprep.subr.bf16.mxu0 %v649
    %982 = vmatpush2.bf16.msra.mxu0 %v648
    %983 = vmatprep.subr.bf16.mxu0 %v643
    %984 = vmatpush2.bf16.msra.mxu0 %v642
    %985 = vmatprep.subr.bf16.mxu0 %v637
    %986 = vmatpush2.bf16.msra.mxu0 %v636
    %987 = vmatprep.subr.bf16.mxu0 %v631
    %988 = vmatpush2.bf16.msra.mxu0 %v630
    %989 = vmatprep.subr.bf16.mxu0 %v625
    %990 = vmatpush2.bf16.msra.mxu0 %v624
    %991 = vmatprep.mubr.bf16.mxu0 %v191
    %992 = vmatmul.mubr.bf16.gmra.mxu0 %v190
    %v993 = vpop.f32.mrf.mxu0
    %v994 = vadd.f32 0.0, %v993
    %v995 = vpop.f32.mrf.mxu0
    %v996 = vadd.f32 0.0, %v995
    %v997 = vpop.f32.mrf.mxu0
    %v998 = vadd.f32 0.0, %v997
    %v999 = vpop.f32.mrf.mxu0
    %v1000 = vadd.f32 0.0, %v999
    %1001 = vmatprep.mubr.bf16.mxu0 %v193
    %1002 = vmatmul.mubr.bf16.gmra.mxu0 %v192
    %v1003 = vpop.f32.mrf.mxu0
    %v1004 = vadd.f32 0.0, %v1003
    %v1005 = vpop.f32.mrf.mxu0
    %v1006 = vadd.f32 0.0, %v1005
    %v1007 = vpop.f32.mrf.mxu0
    %v1008 = vadd.f32 0.0, %v1007
    %v1009 = vpop.f32.mrf.mxu0
    %v1010 = vadd.f32 0.0, %v1009
    %1011 = vmatprep.mubr.bf16.mxu0 %v195
    %1012 = vmatmul.mubr.bf16.gmra.mxu0 %v194
    %v1013 = vpop.f32.mrf.mxu0
    %v1014 = vadd.f32 0.0, %v1013
    %v1015 = vpop.f32.mrf.mxu0
    %v1016 = vadd.f32 0.0, %v1015
    %v1017 = vpop.f32.mrf.mxu0
    %v1018 = vadd.f32 0.0, %v1017
    %v1019 = vpop.f32.mrf.mxu0
    %v1020 = vadd.f32 0.0, %v1019
    %1021 = vmatprep.mubr.bf16.mxu0 %v197
    %1022 = vmatmul.mubr.bf16.gmra.mxu0 %v196
    %v1023 = vpop.f32.mrf.mxu0
    %v1024 = vadd.f32 0.0, %v1023
    %v1025 = vpop.f32.mrf.mxu0
    %v1026 = vadd.f32 0.0, %v1025
    %v1027 = vpop.f32.mrf.mxu0
    %v1028 = vadd.f32 0.0, %v1027
    %v1029 = vpop.f32.mrf.mxu0
    %v1030 = vadd.f32 0.0, %v1029
    %1031 = vmatprep.mubr.bf16.mxu0 %v199
    %1032 = vmatmul.mubr.bf16.gmra.mxu0 %v198
    %v1033 = vpop.f32.mrf.mxu0
    %v1034 = vadd.f32 0.0, %v1033
    %v1035 = vpop.f32.mrf.mxu0
    %v1036 = vadd.f32 0.0, %v1035
    %v1037 = vpop.f32.mrf.mxu0
    %v1038 = vadd.f32 0.0, %v1037
    %v1039 = vpop.f32.mrf.mxu0
    %v1040 = vadd.f32 0.0, %v1039
    %1041 = vmatprep.mubr.bf16.mxu0 %v201
    %1042 = vmatmul.mubr.bf16.gmra.mxu0 %v200
    %v1043 = vpop.f32.mrf.mxu0
    %v1044 = vadd.f32 0.0, %v1043
    %v1045 = vpop.f32.mrf.mxu0
    %v1046 = vadd.f32 0.0, %v1045
    %v1047 = vpop.f32.mrf.mxu0
    %v1048 = vadd.f32 0.0, %v1047
    %v1049 = vpop.f32.mrf.mxu0
    %v1050 = vadd.f32 0.0, %v1049
    %1051 = vmatprep.mubr.bf16.mxu0 %v203
    %1052 = vmatmul.mubr.bf16.gmra.mxu0 %v202
    %v1053 = vpop.f32.mrf.mxu0
    %v1054 = vadd.f32 0.0, %v1053
    %v1055 = vpop.f32.mrf.mxu0
    %v1056 = vadd.f32 0.0, %v1055
    %v1057 = vpop.f32.mrf.mxu0
    %v1058 = vadd.f32 0.0, %v1057
    %v1059 = vpop.f32.mrf.mxu0
    %v1060 = vadd.f32 0.0, %v1059
    %1061 = vmatprep.mubr.bf16.mxu0 %v205
    %1062 = vmatmul.mubr.bf16.gmra.mxu0 %v204
    %v1063 = vpop.f32.mrf.mxu0
    %v1064 = vadd.f32 0.0, %v1063
    %v1065 = vpop.f32.mrf.mxu0
    %v1066 = vadd.f32 0.0, %v1065
    %v1067 = vpop.f32.mrf.mxu0
    %v1068 = vadd.f32 0.0, %v1067
    %v1069 = vpop.f32.mrf.mxu0
    %v1070 = vadd.f32 0.0, %v1069
    %1071 = vmatprep.mubr.bf16.mxu0 %v271
    %1072 = vmatmul.mubr.bf16.gmra.mxu0 %v270
    %v1073 = vpop.f32.mrf.mxu0
    %v1074 = vadd.f32 0.0, %v1073
    %v1075 = vpop.f32.mrf.mxu0
    %v1076 = vadd.f32 0.0, %v1075
    %v1077 = vpop.f32.mrf.mxu0
    %v1078 = vadd.f32 0.0, %v1077
    %v1079 = vpop.f32.mrf.mxu0
    %v1080 = vadd.f32 0.0, %v1079
    %1081 = vmatprep.mubr.bf16.mxu0 %v273
    %1082 = vmatmul.mubr.bf16.gmra.mxu0 %v272
    %v1083 = vpop.f32.mrf.mxu0
    %v1084 = vadd.f32 0.0, %v1083
    %v1085 = vpop.f32.mrf.mxu0
    %v1086 = vadd.f32 0.0, %v1085
    %v1087 = vpop.f32.mrf.mxu0
    %v1088 = vadd.f32 0.0, %v1087
    %v1089 = vpop.f32.mrf.mxu0
    %v1090 = vadd.f32 0.0, %v1089
    %1091 = vmatprep.mubr.bf16.mxu0 %v275
    %1092 = vmatmul.mubr.bf16.gmra.mxu0 %v274
    %v1093 = vpop.f32.mrf.mxu0
    %v1094 = vadd.f32 0.0, %v1093
    %v1095 = vpop.f32.mrf.mxu0
    %v1096 = vadd.f32 0.0, %v1095
    %v1097 = vpop.f32.mrf.mxu0
    %v1098 = vadd.f32 0.0, %v1097
    %v1099 = vpop.f32.mrf.mxu0
    %v1100 = vadd.f32 0.0, %v1099
    %1101 = vmatprep.mubr.bf16.mxu0 %v277
    %1102 = vmatmul.mubr.bf16.gmra.mxu0 %v276
    %v1103 = vpop.f32.mrf.mxu0
    %v1104 = vadd.f32 0.0, %v1103
    %v1105 = vpop.f32.mrf.mxu0
    %v1106 = vadd.f32 0.0, %v1105
    %v1107 = vpop.f32.mrf.mxu0
    %v1108 = vadd.f32 0.0, %v1107
    %v1109 = vpop.f32.mrf.mxu0
    %v1110 = vadd.f32 0.0, %v1109
    %1111 = vmatprep.mubr.bf16.mxu0 %v279
    %1112 = vmatmul.mubr.bf16.gmra.mxu0 %v278
    %v1113 = vpop.f32.mrf.mxu0
    %v1114 = vadd.f32 0.0, %v1113
    %v1115 = vpop.f32.mrf.mxu0
    %v1116 = vadd.f32 0.0, %v1115
    %v1117 = vpop.f32.mrf.mxu0
    %v1118 = vadd.f32 0.0, %v1117
    %v1119 = vpop.f32.mrf.mxu0
    %v1120 = vadd.f32 0.0, %v1119
    %1121 = vmatprep.mubr.bf16.mxu0 %v281
    %1122 = vmatmul.mubr.bf16.gmra.mxu0 %v280
    %v1123 = vpop.f32.mrf.mxu0
    %v1124 = vadd.f32 0.0, %v1123
    %v1125 = vpop.f32.mrf.mxu0
    %v1126 = vadd.f32 0.0, %v1125
    %v1127 = vpop.f32.mrf.mxu0
    %v1128 = vadd.f32 0.0, %v1127
    %v1129 = vpop.f32.mrf.mxu0
    %v1130 = vadd.f32 0.0, %v1129
    %1131 = vmatprep.mubr.bf16.mxu0 %v283
    %1132 = vmatmul.mubr.bf16.gmra.mxu0 %v282
    %v1133 = vpop.f32.mrf.mxu0
    %v1134 = vadd.f32 0.0, %v1133
    %v1135 = vpop.f32.mrf.mxu0
    %v1136 = vadd.f32 0.0, %v1135
    %v1137 = vpop.f32.mrf.mxu0
    %v1138 = vadd.f32 0.0, %v1137
    %v1139 = vpop.f32.mrf.mxu0
    %v1140 = vadd.f32 0.0, %v1139
    %1141 = vmatprep.mubr.bf16.mxu0 %v285
    %1142 = vmatmul.mubr.bf16.gmra.mxu0 %v284
    %v1143 = vpop.f32.mrf.mxu0
    %v1144 = vadd.f32 0.0, %v1143
    %v1145 = vpop.f32.mrf.mxu0
    %v1146 = vadd.f32 0.0, %v1145
    %v1147 = vpop.f32.mrf.mxu0
    %v1148 = vadd.f32 0.0, %v1147
    %v1149 = vpop.f32.mrf.mxu0
    %v1150 = vadd.f32 0.0, %v1149
    %1151 = vdwg.mxu0
    %1152 = vmatprep.subr.bf16.mxu0 %v621
    %1153 = vmatpush1.bf16.msra.mxu0 %v620
    %1154 = vmatprep.subr.bf16.mxu0 %v615
    %1155 = vmatpush1.bf16.msra.mxu0 %v614
    %1156 = vmatprep.subr.bf16.mxu0 %v609
    %1157 = vmatpush1.bf16.msra.mxu0 %v608
    %1158 = vmatprep.subr.bf16.mxu0 %v603
    %1159 = vmatpush1.bf16.msra.mxu0 %v602
    %1160 = vmatprep.subr.bf16.mxu0 %v597
    %1161 = vmatpush1.bf16.msra.mxu0 %v596
    %1162 = vmatprep.subr.bf16.mxu0 %v591
    %1163 = vmatpush1.bf16.msra.mxu0 %v590
    %1164 = vmatprep.subr.bf16.mxu0 %v585
    %1165 = vmatpush1.bf16.msra.mxu0 %v584
    %1166 = vmatprep.subr.bf16.mxu0 %v579
    %1167 = vmatpush1.bf16.msra.mxu0 %v578
    %1168 = vmatprep.subr.bf16.mxu0 %v669
    %1169 = vmatpush2.bf16.msra.mxu0 %v668
    %1170 = vmatprep.subr.bf16.mxu0 %v663
    %1171 = vmatpush2.bf16.msra.mxu0 %v662
    %1172 = vmatprep.subr.bf16.mxu0 %v657
    %1173 = vmatpush2.bf16.msra.mxu0 %v656
    %1174 = vmatprep.subr.bf16.mxu0 %v651
    %1175 = vmatpush2.bf16.msra.mxu0 %v650
    %1176 = vmatprep.subr.bf16.mxu0 %v645
    %1177 = vmatpush2.bf16.msra.mxu0 %v644
    %1178 = vmatprep.subr.bf16.mxu0 %v639
    %1179 = vmatpush2.bf16.msra.mxu0 %v638
    %1180 = vmatprep.subr.bf16.mxu0 %v633
    %1181 = vmatpush2.bf16.msra.mxu0 %v632
    %1182 = vmatprep.subr.bf16.mxu0 %v627
    %1183 = vmatpush2.bf16.msra.mxu0 %v626
    %1184 = vmatprep.mubr.bf16.mxu0 %v191
    %1185 = vmatmul.mubr.bf16.gmra.mxu0 %v190
    %v1186 = vpop.f32.mrf.mxu0
    %v1187 = vadd.f32 0.0, %v1186
    %v1188 = vpop.f32.mrf.mxu0
    %v1189 = vadd.f32 0.0, %v1188
    %v1190 = vpop.f32.mrf.mxu0
    %v1191 = vadd.f32 0.0, %v1190
    %v1192 = vpop.f32.mrf.mxu0
    %v1193 = vadd.f32 0.0, %v1192
    %1194 = vmatprep.mubr.bf16.mxu0 %v193
    %1195 = vmatmul.mubr.bf16.gmra.mxu0 %v192
    %v1196 = vpop.f32.mrf.mxu0
    %v1197 = vadd.f32 0.0, %v1196
    %v1198 = vpop.f32.mrf.mxu0
    %v1199 = vadd.f32 0.0, %v1198
    %v1200 = vpop.f32.mrf.mxu0
    %v1201 = vadd.f32 0.0, %v1200
    %v1202 = vpop.f32.mrf.mxu0
    %v1203 = vadd.f32 0.0, %v1202
    %1204 = vmatprep.mubr.bf16.mxu0 %v195
    %1205 = vmatmul.mubr.bf16.gmra.mxu0 %v194
    %v1206 = vpop.f32.mrf.mxu0
    %v1207 = vadd.f32 0.0, %v1206
    %v1208 = vpop.f32.mrf.mxu0
    %v1209 = vadd.f32 0.0, %v1208
    %v1210 = vpop.f32.mrf.mxu0
    %v1211 = vadd.f32 0.0, %v1210
    %v1212 = vpop.f32.mrf.mxu0
    %v1213 = vadd.f32 0.0, %v1212
    %1214 = vmatprep.mubr.bf16.mxu0 %v197
    %1215 = vmatmul.mubr.bf16.gmra.mxu0 %v196
    %v1216 = vpop.f32.mrf.mxu0
    %v1217 = vadd.f32 0.0, %v1216
    %v1218 = vpop.f32.mrf.mxu0
    %v1219 = vadd.f32 0.0, %v1218
    %v1220 = vpop.f32.mrf.mxu0
    %v1221 = vadd.f32 0.0, %v1220
    %v1222 = vpop.f32.mrf.mxu0
    %v1223 = vadd.f32 0.0, %v1222
    %1224 = vmatprep.mubr.bf16.mxu0 %v199
    %1225 = vmatmul.mubr.bf16.gmra.mxu0 %v198
    %v1226 = vpop.f32.mrf.mxu0
    %v1227 = vadd.f32 0.0, %v1226
    %v1228 = vpop.f32.mrf.mxu0
    %v1229 = vadd.f32 0.0, %v1228
    %v1230 = vpop.f32.mrf.mxu0
    %v1231 = vadd.f32 0.0, %v1230
    %v1232 = vpop.f32.mrf.mxu0
    %v1233 = vadd.f32 0.0, %v1232
    %1234 = vmatprep.mubr.bf16.mxu0 %v201
    %1235 = vmatmul.mubr.bf16.gmra.mxu0 %v200
    %v1236 = vpop.f32.mrf.mxu0
    %v1237 = vadd.f32 0.0, %v1236
    %v1238 = vpop.f32.mrf.mxu0
    %v1239 = vadd.f32 0.0, %v1238
    %v1240 = vpop.f32.mrf.mxu0
    %v1241 = vadd.f32 0.0, %v1240
    %v1242 = vpop.f32.mrf.mxu0
    %v1243 = vadd.f32 0.0, %v1242
    %1244 = vmatprep.mubr.bf16.mxu0 %v203
    %1245 = vmatmul.mubr.bf16.gmra.mxu0 %v202
    %v1246 = vpop.f32.mrf.mxu0
    %v1247 = vadd.f32 0.0, %v1246
    %v1248 = vpop.f32.mrf.mxu0
    %v1249 = vadd.f32 0.0, %v1248
    %v1250 = vpop.f32.mrf.mxu0
    %v1251 = vadd.f32 0.0, %v1250
    %v1252 = vpop.f32.mrf.mxu0
    %v1253 = vadd.f32 0.0, %v1252
    %1254 = vmatprep.mubr.bf16.mxu0 %v205
    %1255 = vmatmul.mubr.bf16.gmra.mxu0 %v204
    %v1256 = vpop.f32.mrf.mxu0
    %v1257 = vadd.f32 0.0, %v1256
    %v1258 = vpop.f32.mrf.mxu0
    %v1259 = vadd.f32 0.0, %v1258
    %v1260 = vpop.f32.mrf.mxu0
    %v1261 = vadd.f32 0.0, %v1260
    %v1262 = vpop.f32.mrf.mxu0
    %v1263 = vadd.f32 0.0, %v1262
    %1264 = vmatprep.mubr.bf16.mxu0 %v271
    %1265 = vmatmul.mubr.bf16.gmra.mxu0 %v270
    %v1266 = vpop.f32.mrf.mxu0
    %v1267 = vadd.f32 0.0, %v1266
    %v1268 = vpop.f32.mrf.mxu0
    %v1269 = vadd.f32 0.0, %v1268
    %v1270 = vpop.f32.mrf.mxu0
    %v1271 = vadd.f32 0.0, %v1270
    %v1272 = vpop.f32.mrf.mxu0
    %v1273 = vadd.f32 0.0, %v1272
    %1274 = vmatprep.mubr.bf16.mxu0 %v273
    %1275 = vmatmul.mubr.bf16.gmra.mxu0 %v272
    %v1276 = vpop.f32.mrf.mxu0
    %v1277 = vadd.f32 0.0, %v1276
    %v1278 = vpop.f32.mrf.mxu0
    %v1279 = vadd.f32 0.0, %v1278
    %v1280 = vpop.f32.mrf.mxu0
    %v1281 = vadd.f32 0.0, %v1280
    %v1282 = vpop.f32.mrf.mxu0
    %v1283 = vadd.f32 0.0, %v1282
    %1284 = vmatprep.mubr.bf16.mxu0 %v275
    %1285 = vmatmul.mubr.bf16.gmra.mxu0 %v274
    %v1286 = vpop.f32.mrf.mxu0
    %v1287 = vadd.f32 0.0, %v1286
    %v1288 = vpop.f32.mrf.mxu0
    %v1289 = vadd.f32 0.0, %v1288
    %v1290 = vpop.f32.mrf.mxu0
    %v1291 = vadd.f32 0.0, %v1290
    %v1292 = vpop.f32.mrf.mxu0
    %v1293 = vadd.f32 0.0, %v1292
    %1294 = vmatprep.mubr.bf16.mxu0 %v277
    %1295 = vmatmul.mubr.bf16.gmra.mxu0 %v276
    %v1296 = vpop.f32.mrf.mxu0
    %v1297 = vadd.f32 0.0, %v1296
    %v1298 = vpop.f32.mrf.mxu0
    %v1299 = vadd.f32 0.0, %v1298
    %v1300 = vpop.f32.mrf.mxu0
    %v1301 = vadd.f32 0.0, %v1300
    %v1302 = vpop.f32.mrf.mxu0
    %v1303 = vadd.f32 0.0, %v1302
    %1304 = vmatprep.mubr.bf16.mxu0 %v279
    %1305 = vmatmul.mubr.bf16.gmra.mxu0 %v278
    %v1306 = vpop.f32.mrf.mxu0
    %v1307 = vadd.f32 0.0, %v1306
    %v1308 = vpop.f32.mrf.mxu0
    %v1309 = vadd.f32 0.0, %v1308
    %v1310 = vpop.f32.mrf.mxu0
    %v1311 = vadd.f32 0.0, %v1310
    %v1312 = vpop.f32.mrf.mxu0
    %v1313 = vadd.f32 0.0, %v1312
    %1314 = vmatprep.mubr.bf16.mxu0 %v281
    %1315 = vmatmul.mubr.bf16.gmra.mxu0 %v280
    %v1316 = vpop.f32.mrf.mxu0
    %v1317 = vadd.f32 0.0, %v1316
    %v1318 = vpop.f32.mrf.mxu0
    %v1319 = vadd.f32 0.0, %v1318
    %v1320 = vpop.f32.mrf.mxu0
    %v1321 = vadd.f32 0.0, %v1320
    %v1322 = vpop.f32.mrf.mxu0
    %v1323 = vadd.f32 0.0, %v1322
    %1324 = vmatprep.mubr.bf16.mxu0 %v283
    %1325 = vmatmul.mubr.bf16.gmra.mxu0 %v282
    %v1326 = vpop.f32.mrf.mxu0
    %v1327 = vadd.f32 0.0, %v1326
    %v1328 = vpop.f32.mrf.mxu0
    %v1329 = vadd.f32 0.0, %v1328
    %v1330 = vpop.f32.mrf.mxu0
    %v1331 = vadd.f32 0.0, %v1330
    %v1332 = vpop.f32.mrf.mxu0
    %v1333 = vadd.f32 0.0, %v1332
    %1334 = vmatprep.mubr.bf16.mxu0 %v285
    %1335 = vmatmul.mubr.bf16.gmra.mxu0 %v284
    %v1336 = vpop.f32.mrf.mxu0
    %v1337 = vadd.f32 0.0, %v1336
    %v1338 = vpop.f32.mrf.mxu0
    %v1339 = vadd.f32 0.0, %v1338
    %v1340 = vpop.f32.mrf.mxu0
    %v1341 = vadd.f32 0.0, %v1340
    %v1342 = vpop.f32.mrf.mxu0
    %v1343 = vadd.f32 0.0, %v1342
    %1344 = vdwg.mxu0
    %v1345 = vadd.f32 %v801, %v881
    %v1346 = vadd.f32 %v803, %v883
    %v1347 = vadd.f32 %v994, %v1074
    %v1348 = vadd.f32 %v996, %v1076
    %v1349 = vadd.f32 %v1187, %v1267
    %v1350 = vadd.f32 %v1189, %v1269
    %v1351 = vadd.f32 %v805, %v885
    %v1352 = vadd.f32 %v807, %v887
    %v1353 = vadd.f32 %v998, %v1078
    %v1354 = vadd.f32 %v1000, %v1080
    %v1355 = vadd.f32 %v1191, %v1271
    %v1356 = vadd.f32 %v1193, %v1273
    %v1357 = vadd.f32 %v811, %v891
    %v1358 = vadd.f32 %v813, %v893
    %v1359 = vadd.f32 %v1004, %v1084
    %v1360 = vadd.f32 %v1006, %v1086
    %v1361 = vadd.f32 %v1197, %v1277
    %v1362 = vadd.f32 %v1199, %v1279
    %v1363 = vadd.f32 %v815, %v895
    %v1364 = vadd.f32 %v817, %v897
    %v1365 = vadd.f32 %v1008, %v1088
    %v1366 = vadd.f32 %v1010, %v1090
    %v1367 = vadd.f32 %v1201, %v1281
    %v1368 = vadd.f32 %v1203, %v1283
    %v1369 = vadd.f32 %v821, %v901
    %v1370 = vadd.f32 %v823, %v903
    %v1371 = vadd.f32 %v1014, %v1094
    %v1372 = vadd.f32 %v1016, %v1096
    %v1373 = vadd.f32 %v1207, %v1287
    %v1374 = vadd.f32 %v1209, %v1289
    %v1375 = vadd.f32 %v825, %v905
    %v1376 = vadd.f32 %v827, %v907
    %v1377 = vadd.f32 %v1018, %v1098
    %v1378 = vadd.f32 %v1020, %v1100
    %v1379 = vadd.f32 %v1211, %v1291
    %v1380 = vadd.f32 %v1213, %v1293
    %v1381 = vadd.f32 %v831, %v911
    %v1382 = vadd.f32 %v833, %v913
    %v1383 = vadd.f32 %v1024, %v1104
    %v1384 = vadd.f32 %v1026, %v1106
    %v1385 = vadd.f32 %v1217, %v1297
    %v1386 = vadd.f32 %v1219, %v1299
    %v1387 = vadd.f32 %v835, %v915
    %v1388 = vadd.f32 %v837, %v917
    %v1389 = vadd.f32 %v1028, %v1108
    %v1390 = vadd.f32 %v1030, %v1110
    %v1391 = vadd.f32 %v1221, %v1301
    %v1392 = vadd.f32 %v1223, %v1303
    %v1393 = vadd.f32 %v841, %v921
    %v1394 = vadd.f32 %v843, %v923
    %v1395 = vadd.f32 %v1034, %v1114
    %v1396 = vadd.f32 %v1036, %v1116
    %v1397 = vadd.f32 %v1227, %v1307
    %v1398 = vadd.f32 %v1229, %v1309
    %v1399 = vadd.f32 %v845, %v925
    %v1400 = vadd.f32 %v847, %v927
    %v1401 = vadd.f32 %v1038, %v1118
    %v1402 = vadd.f32 %v1040, %v1120
    %v1403 = vadd.f32 %v1231, %v1311
    %v1404 = vadd.f32 %v1233, %v1313
    %v1405 = vadd.f32 %v851, %v931
    %v1406 = vadd.f32 %v853, %v933
    %v1407 = vadd.f32 %v1044, %v1124
    %v1408 = vadd.f32 %v1046, %v1126
    %v1409 = vadd.f32 %v1237, %v1317
    %v1410 = vadd.f32 %v1239, %v1319
    %v1411 = vadd.f32 %v855, %v935
    %v1412 = vadd.f32 %v857, %v937
    %v1413 = vadd.f32 %v1048, %v1128
    %v1414 = vadd.f32 %v1050, %v1130
    %v1415 = vadd.f32 %v1241, %v1321
    %v1416 = vadd.f32 %v1243, %v1323
    %v1417 = vadd.f32 %v861, %v941
    %v1418 = vadd.f32 %v863, %v943
    %v1419 = vadd.f32 %v1054, %v1134
    %v1420 = vadd.f32 %v1056, %v1136
    %v1421 = vadd.f32 %v1247, %v1327
    %v1422 = vadd.f32 %v1249, %v1329
    %v1423 = vadd.f32 %v865, %v945
    %v1424 = vadd.f32 %v867, %v947
    %v1425 = vadd.f32 %v1058, %v1138
    %v1426 = vadd.f32 %v1060, %v1140
    %v1427 = vadd.f32 %v1251, %v1331
    %v1428 = vadd.f32 %v1253, %v1333
    %v1429 = vadd.f32 %v871, %v951
    %v1430 = vadd.f32 %v873, %v953
    %v1431 = vadd.f32 %v1064, %v1144
    %v1432 = vadd.f32 %v1066, %v1146
    %v1433 = vadd.f32 %v1257, %v1337
    %v1434 = vadd.f32 %v1259, %v1339
    %v1435 = vadd.f32 %v875, %v955
    %v1436 = vadd.f32 %v877, %v957
    %v1437 = vadd.f32 %v1068, %v1148
    %v1438 = vadd.f32 %v1070, %v1150
    %v1439 = vadd.f32 %v1261, %v1341
    %v1440 = vadd.f32 %v1263, %v1343
    %v1441 = vmax.f32 %v1345, %v1347
    %v1442 = vmax.f32 %v1346, %v1348
    %v1443 = vmax.f32 %v1351, %v1353
    %v1444 = vmax.f32 %v1352, %v1354
    %v1445 = vmax.f32 %v1357, %v1359
    %v1446 = vmax.f32 %v1358, %v1360
    %v1447 = vmax.f32 %v1363, %v1365
    %v1448 = vmax.f32 %v1364, %v1366
    %v1449 = vmax.f32 %v1369, %v1371
    %v1450 = vmax.f32 %v1370, %v1372
    %v1451 = vmax.f32 %v1375, %v1377
    %v1452 = vmax.f32 %v1376, %v1378
    %v1453 = vmax.f32 %v1381, %v1383
    %v1454 = vmax.f32 %v1382, %v1384
    %v1455 = vmax.f32 %v1387, %v1389
    %v1456 = vmax.f32 %v1388, %v1390
    %v1457 = vmax.f32 %v1393, %v1395
    %v1458 = vmax.f32 %v1394, %v1396
    %v1459 = vmax.f32 %v1399, %v1401
    %v1460 = vmax.f32 %v1400, %v1402
    %v1461 = vmax.f32 %v1405, %v1407
    %v1462 = vmax.f32 %v1406, %v1408
    %v1463 = vmax.f32 %v1411, %v1413
    %v1464 = vmax.f32 %v1412, %v1414
    %v1465 = vmax.f32 %v1417, %v1419
    %v1466 = vmax.f32 %v1418, %v1420
    %v1467 = vmax.f32 %v1423, %v1425
    %v1468 = vmax.f32 %v1424, %v1426
    %v1469 = vmax.f32 %v1429, %v1431
    %v1470 = vmax.f32 %v1430, %v1432
    %v1471 = vmax.f32 %v1435, %v1437
    %v1472 = vmax.f32 %v1436, %v1438
    %v1473 = vmax.f32 %v1441, %v1349
    %v1474 = vmax.f32 %v1442, %v1350
    %v1475 = vmax.f32 %v1443, %v1355
    %v1476 = vmax.f32 %v1444, %v1356
    %v1477 = vmax.f32 %v1445, %v1361
    %v1478 = vmax.f32 %v1446, %v1362
    %v1479 = vmax.f32 %v1447, %v1367
    %v1480 = vmax.f32 %v1448, %v1368
    %v1481 = vmax.f32 %v1449, %v1373
    %v1482 = vmax.f32 %v1450, %v1374
    %v1483 = vmax.f32 %v1451, %v1379
    %v1484 = vmax.f32 %v1452, %v1380
    %v1485 = vmax.f32 %v1453, %v1385
    %v1486 = vmax.f32 %v1454, %v1386
    %v1487 = vmax.f32 %v1455, %v1391
    %v1488 = vmax.f32 %v1456, %v1392
    %v1489 = vmax.f32 %v1457, %v1397
    %v1490 = vmax.f32 %v1458, %v1398
    %v1491 = vmax.f32 %v1459, %v1403
    %v1492 = vmax.f32 %v1460, %v1404
    %v1493 = vmax.f32 %v1461, %v1409
    %v1494 = vmax.f32 %v1462, %v1410
    %v1495 = vmax.f32 %v1463, %v1415
    %v1496 = vmax.f32 %v1464, %v1416
    %v1497 = vmax.f32 %v1465, %v1421
    %v1498 = vmax.f32 %v1466, %v1422
    %v1499 = vmax.f32 %v1467, %v1427
    %v1500 = vmax.f32 %v1468, %v1428
    %v1501 = vmax.f32 %v1469, %v1433
    %v1502 = vmax.f32 %v1470, %v1434
    %v1503 = vmax.f32 %v1471, %v1439
    %v1504 = vmax.f32 %v1472, %v1440
    %v1505 = vld [vmem:[#allocation7] sm:$0xff]
    %v1506 = vld [vmem:[#allocation7 + $0x8] sm:$0xff]
    %v1507 = vld [vmem:[#allocation7 + $0x10] sm:$0xff]
    %v1508 = vld [vmem:[#allocation7 + $0x18] sm:$0xff]
    %v1509 = vld [vmem:[#allocation7 + $0x20] sm:$0xff]
    %v1510 = vld [vmem:[#allocation7 + $0x28] sm:$0xff]
    %v1511 = vld [vmem:[#allocation7 + $0x30] sm:$0xff]
    %v1512 = vld [vmem:[#allocation7 + $0x38] sm:$0xff]
    %v1513 = vld [vmem:[#allocation7 + $0x40] sm:$0xff]
    %v1514 = vld [vmem:[#allocation7 + $0x48] sm:$0xff]
    %v1515 = vld [vmem:[#allocation7 + $0x50] sm:$0xff]
    %v1516 = vld [vmem:[#allocation7 + $0x58] sm:$0xff]
    %v1517 = vld [vmem:[#allocation7 + $0x60] sm:$0xff]
    %v1518 = vld [vmem:[#allocation7 + $0x68] sm:$0xff]
    %v1519 = vld [vmem:[#allocation7 + $0x70] sm:$0xff]
    %v1520 = vld [vmem:[#allocation7 + $0x78] sm:$0xff]
    %v1521 = vld [vmem:[#allocation7 + $0x80] sm:$0xff]
    %v1522 = vld [vmem:[#allocation7 + $0x88] sm:$0xff]
    %v1523 = vld [vmem:[#allocation7 + $0x90] sm:$0xff]
    %v1524 = vld [vmem:[#allocation7 + $0x98] sm:$0xff]
    %v1525 = vld [vmem:[#allocation7 + $0xa0] sm:$0xff]
    %v1526 = vld [vmem:[#allocation7 + $0xa8] sm:$0xff]
    %v1527 = vld [vmem:[#allocation7 + $0xb0] sm:$0xff]
    %v1528 = vld [vmem:[#allocation7 + $0xb8] sm:$0xff]
    %v1529 = vld [vmem:[#allocation7 + $0xc0] sm:$0xff]
    %v1530 = vld [vmem:[#allocation7 + $0xc8] sm:$0xff]
    %v1531 = vld [vmem:[#allocation7 + $0xd0] sm:$0xff]
    %v1532 = vld [vmem:[#allocation7 + $0xd8] sm:$0xff]
    %v1533 = vld [vmem:[#allocation7 + $0xe0] sm:$0xff]
    %v1534 = vld [vmem:[#allocation7 + $0xe8] sm:$0xff]
    %v1535 = vld [vmem:[#allocation7 + $0xf0] sm:$0xff]
    %v1536 = vld [vmem:[#allocation7 + $0xf8] sm:$0xff]
    %v1537 = vld [vmem:[#allocation7 + $0x100] sm:$0xff]
    %v1538 = vld [vmem:[#allocation7 + $0x108] sm:$0xff]
    %v1539 = vld [vmem:[#allocation7 + $0x110] sm:$0xff]
    %v1540 = vld [vmem:[#allocation7 + $0x118] sm:$0xff]
    %v1541 = vld [vmem:[#allocation7 + $0x120] sm:$0xff]
    %v1542 = vld [vmem:[#allocation7 + $0x128] sm:$0xff]
    %v1543 = vld [vmem:[#allocation7 + $0x130] sm:$0xff]
    %v1544 = vld [vmem:[#allocation7 + $0x138] sm:$0xff]
    %v1545 = vld [vmem:[#allocation7 + $0x140] sm:$0xff]
    %v1546 = vld [vmem:[#allocation7 + $0x148] sm:$0xff]
    %v1547 = vld [vmem:[#allocation7 + $0x150] sm:$0xff]
    %v1548 = vld [vmem:[#allocation7 + $0x158] sm:$0xff]
    %v1549 = vld [vmem:[#allocation7 + $0x160] sm:$0xff]
    %v1550 = vld [vmem:[#allocation7 + $0x168] sm:$0xff]
    %v1551 = vld [vmem:[#allocation7 + $0x170] sm:$0xff]
    %v1552 = vld [vmem:[#allocation7 + $0x178] sm:$0xff]
    %v1553 = vld [vmem:[#allocation7 + $0x180] sm:$0xff]
    %v1554 = vld [vmem:[#allocation7 + $0x188] sm:$0xff]
    %v1555 = vld [vmem:[#allocation7 + $0x190] sm:$0xff]
    %v1556 = vld [vmem:[#allocation7 + $0x198] sm:$0xff]
    %v1557 = vld [vmem:[#allocation7 + $0x1a0] sm:$0xff]
    %v1558 = vld [vmem:[#allocation7 + $0x1a8] sm:$0xff]
    %v1559 = vld [vmem:[#allocation7 + $0x1b0] sm:$0xff]
    %v1560 = vld [vmem:[#allocation7 + $0x1b8] sm:$0xff]
    %v1561 = vld [vmem:[#allocation7 + $0x1c0] sm:$0xff]
    %v1562 = vld [vmem:[#allocation7 + $0x1c8] sm:$0xff]
    %v1563 = vld [vmem:[#allocation7 + $0x1d0] sm:$0xff]
    %v1564 = vld [vmem:[#allocation7 + $0x1d8] sm:$0xff]
    %v1565 = vld [vmem:[#allocation7 + $0x1e0] sm:$0xff]
    %v1566 = vld [vmem:[#allocation7 + $0x1e8] sm:$0xff]
    %v1567 = vld [vmem:[#allocation7 + $0x1f0] sm:$0xff]
    %v1568 = vld [vmem:[#allocation7 + $0x1f8] sm:$0xff]
    %v1569 = vld [vmem:[#allocation7 + $0x200] sm:$0xff]
    %v1570 = vld [vmem:[#allocation7 + $0x208] sm:$0xff]
    %v1571 = vld [vmem:[#allocation7 + $0x210] sm:$0xff]
    %v1572 = vld [vmem:[#allocation7 + $0x218] sm:$0xff]
    %v1573 = vld [vmem:[#allocation7 + $0x220] sm:$0xff]
    %v1574 = vld [vmem:[#allocation7 + $0x228] sm:$0xff]
    %v1575 = vld [vmem:[#allocation7 + $0x230] sm:$0xff]
    %v1576 = vld [vmem:[#allocation7 + $0x238] sm:$0xff]
    %v1577 = vld [vmem:[#allocation7 + $0x240] sm:$0xff]
    %v1578 = vld [vmem:[#allocation7 + $0x248] sm:$0xff]
    %v1579 = vld [vmem:[#allocation7 + $0x250] sm:$0xff]
    %v1580 = vld [vmem:[#allocation7 + $0x258] sm:$0xff]
    %v1581 = vld [vmem:[#allocation7 + $0x260] sm:$0xff]
    %v1582 = vld [vmem:[#allocation7 + $0x268] sm:$0xff]
    %v1583 = vld [vmem:[#allocation7 + $0x270] sm:$0xff]
    %v1584 = vld [vmem:[#allocation7 + $0x278] sm:$0xff]
    %v1585 = vld [vmem:[#allocation7 + $0x280] sm:$0xff]
    %v1586 = vld [vmem:[#allocation7 + $0x288] sm:$0xff]
    %v1587 = vld [vmem:[#allocation7 + $0x290] sm:$0xff]
    %v1588 = vld [vmem:[#allocation7 + $0x298] sm:$0xff]
    %v1589 = vld [vmem:[#allocation7 + $0x2a0] sm:$0xff]
    %v1590 = vld [vmem:[#allocation7 + $0x2a8] sm:$0xff]
    %v1591 = vld [vmem:[#allocation7 + $0x2b0] sm:$0xff]
    %v1592 = vld [vmem:[#allocation7 + $0x2b8] sm:$0xff]
    %v1593 = vld [vmem:[#allocation7 + $0x2c0] sm:$0xff]
    %v1594 = vld [vmem:[#allocation7 + $0x2c8] sm:$0xff]
    %v1595 = vld [vmem:[#allocation7 + $0x2d0] sm:$0xff]
    %v1596 = vld [vmem:[#allocation7 + $0x2d8] sm:$0xff]
    %v1597 = vld [vmem:[#allocation7 + $0x2e0] sm:$0xff]
    %v1598 = vld [vmem:[#allocation7 + $0x2e8] sm:$0xff]
    %v1599 = vld [vmem:[#allocation7 + $0x2f0] sm:$0xff]
    %v1600 = vld [vmem:[#allocation7 + $0x2f8] sm:$0xff]
    %v1601 = vpack.c.bf16 %v1475, %v1473
    %v1602 = vpack.c.bf16 %v1476, %v1474
    %v1603 = vpack.c.bf16 %v1479, %v1477
    %v1604 = vpack.c.bf16 %v1480, %v1478
    %v1605 = vpack.c.bf16 %v1483, %v1481
    %v1606 = vpack.c.bf16 %v1484, %v1482
    %v1607 = vpack.c.bf16 %v1487, %v1485
    %v1608 = vpack.c.bf16 %v1488, %v1486
    %v1609 = vpack.c.bf16 %v1491, %v1489
    %v1610 = vpack.c.bf16 %v1492, %v1490
    %v1611 = vpack.c.bf16 %v1495, %v1493
    %v1612 = vpack.c.bf16 %v1496, %v1494
    %v1613 = vpack.c.bf16 %v1499, %v1497
    %v1614 = vpack.c.bf16 %v1500, %v1498
    %v1615 = vpack.c.bf16 %v1503, %v1501
    %v1616 = vpack.c.bf16 %v1504, %v1502
    %v1617 = vunpack.c.l.bf16 %v1601
    %v1618 = vunpack.c.l.bf16 %v1602
    %v1619 = vunpack.c.h.bf16 %v1601
    %v1620 = vunpack.c.h.bf16 %v1602
    %v1621 = vunpack.c.l.bf16 %v1603
    %v1622 = vunpack.c.l.bf16 %v1604
    %v1623 = vunpack.c.h.bf16 %v1603
    %v1624 = vunpack.c.h.bf16 %v1604
    %v1625 = vunpack.c.l.bf16 %v1605
    %v1626 = vunpack.c.l.bf16 %v1606
    %v1627 = vunpack.c.h.bf16 %v1605
    %v1628 = vunpack.c.h.bf16 %v1606
    %v1629 = vunpack.c.l.bf16 %v1607
    %v1630 = vunpack.c.l.bf16 %v1608
    %v1631 = vunpack.c.h.bf16 %v1607
    %v1632 = vunpack.c.h.bf16 %v1608
    %v1633 = vunpack.c.l.bf16 %v1609
    %v1634 = vunpack.c.l.bf16 %v1610
    %v1635 = vunpack.c.h.bf16 %v1609
    %v1636 = vunpack.c.h.bf16 %v1610
    %v1637 = vunpack.c.l.bf16 %v1611
    %v1638 = vunpack.c.l.bf16 %v1612
    %v1639 = vunpack.c.h.bf16 %v1611
    %v1640 = vunpack.c.h.bf16 %v1612
    %v1641 = vunpack.c.l.bf16 %v1613
    %v1642 = vunpack.c.l.bf16 %v1614
    %v1643 = vunpack.c.h.bf16 %v1613
    %v1644 = vunpack.c.h.bf16 %v1614
    %v1645 = vunpack.c.l.bf16 %v1615
    %v1646 = vunpack.c.l.bf16 %v1616
    %v1647 = vunpack.c.h.bf16 %v1615
    %v1648 = vunpack.c.h.bf16 %v1616
    %v1649 = vsub.f32 %v1473, %v1617
    %v1650 = vsub.f32 %v1474, %v1618
    %v1651 = vsub.f32 %v1475, %v1619
    %v1652 = vsub.f32 %v1476, %v1620
    %v1653 = vsub.f32 %v1477, %v1621
    %v1654 = vsub.f32 %v1478, %v1622
    %v1655 = vsub.f32 %v1479, %v1623
    %v1656 = vsub.f32 %v1480, %v1624
    %v1657 = vsub.f32 %v1481, %v1625
    %v1658 = vsub.f32 %v1482, %v1626
    %v1659 = vsub.f32 %v1483, %v1627
    %v1660 = vsub.f32 %v1484, %v1628
    %v1661 = vsub.f32 %v1485, %v1629
    %v1662 = vsub.f32 %v1486, %v1630
    %v1663 = vsub.f32 %v1487, %v1631
    %v1664 = vsub.f32 %v1488, %v1632
    %v1665 = vsub.f32 %v1489, %v1633
    %v1666 = vsub.f32 %v1490, %v1634
    %v1667 = vsub.f32 %v1491, %v1635
    %v1668 = vsub.f32 %v1492, %v1636
    %v1669 = vsub.f32 %v1493, %v1637
    %v1670 = vsub.f32 %v1494, %v1638
    %v1671 = vsub.f32 %v1495, %v1639
    %v1672 = vsub.f32 %v1496, %v1640
    %v1673 = vsub.f32 %v1497, %v1641
    %v1674 = vsub.f32 %v1498, %v1642
    %v1675 = vsub.f32 %v1499, %v1643
    %v1676 = vsub.f32 %v1500, %v1644
    %v1677 = vsub.f32 %v1501, %v1645
    %v1678 = vsub.f32 %v1502, %v1646
    %v1679 = vsub.f32 %v1503, %v1647
    %v1680 = vsub.f32 %v1504, %v1648
    %v1681 = vpack.c.bf16 %v1651, %v1649
    %v1682 = vpack.c.bf16 %v1652, %v1650
    %v1683 = vpack.c.bf16 %v1655, %v1653
    %v1684 = vpack.c.bf16 %v1656, %v1654
    %v1685 = vpack.c.bf16 %v1659, %v1657
    %v1686 = vpack.c.bf16 %v1660, %v1658
    %v1687 = vpack.c.bf16 %v1663, %v1661
    %v1688 = vpack.c.bf16 %v1664, %v1662
    %v1689 = vpack.c.bf16 %v1667, %v1665
    %v1690 = vpack.c.bf16 %v1668, %v1666
    %v1691 = vpack.c.bf16 %v1671, %v1669
    %v1692 = vpack.c.bf16 %v1672, %v1670
    %v1693 = vpack.c.bf16 %v1675, %v1673
    %v1694 = vpack.c.bf16 %v1676, %v1674
    %v1695 = vpack.c.bf16 %v1679, %v1677
    %v1696 = vpack.c.bf16 %v1680, %v1678
    %v1793 = vunpack.c.l.b16 %v1505
    %v1794 = vunpack.c.h.b16 %v1505
    %v1795 = vunpack.c.l.b16 %v1506
    %v1796 = vunpack.c.h.b16 %v1506
    %v1797 = vunpack.c.l.b16 %v1507
    %v1798 = vunpack.c.h.b16 %v1507
    %v1799 = vunpack.c.l.b16 %v1508
    %v1800 = vunpack.c.h.b16 %v1508
    %v1801 = vunpack.c.l.b16 %v1509
    %v1802 = vunpack.c.h.b16 %v1509
    %v1803 = vunpack.c.l.b16 %v1510
    %v1804 = vunpack.c.h.b16 %v1510
    %v1805 = vunpack.c.l.b16 %v1511
    %v1806 = vunpack.c.h.b16 %v1511
    %v1807 = vunpack.c.l.b16 %v1512
    %v1808 = vunpack.c.h.b16 %v1512
    %v1809 = vunpack.c.l.b16 %v1513
    %v1810 = vunpack.c.h.b16 %v1513
    %v1811 = vunpack.c.l.b16 %v1514
    %v1812 = vunpack.c.h.b16 %v1514
    %v1813 = vunpack.c.l.b16 %v1515
    %v1814 = vunpack.c.h.b16 %v1515
    %v1815 = vunpack.c.l.b16 %v1516
    %v1816 = vunpack.c.h.b16 %v1516
    %v1817 = vunpack.c.l.b16 %v1517
    %v1818 = vunpack.c.h.b16 %v1517
    %v1819 = vunpack.c.l.b16 %v1518
    %v1820 = vunpack.c.h.b16 %v1518
    %v1821 = vunpack.c.l.b16 %v1519
    %v1822 = vunpack.c.h.b16 %v1519
    %v1823 = vunpack.c.l.b16 %v1520
    %v1824 = vunpack.c.h.b16 %v1520
    %v1825 = vunpack.c.l.b16 %v1521
    %v1826 = vunpack.c.h.b16 %v1521
    %v1827 = vunpack.c.l.b16 %v1522
    %v1828 = vunpack.c.h.b16 %v1522
    %v1829 = vunpack.c.l.b16 %v1523
    %v1830 = vunpack.c.h.b16 %v1523
    %v1831 = vunpack.c.l.b16 %v1524
    %v1832 = vunpack.c.h.b16 %v1524
    %v1833 = vunpack.c.l.b16 %v1525
    %v1834 = vunpack.c.h.b16 %v1525
    %v1835 = vunpack.c.l.b16 %v1526
    %v1836 = vunpack.c.h.b16 %v1526
    %v1837 = vunpack.c.l.b16 %v1527
    %v1838 = vunpack.c.h.b16 %v1527
    %v1839 = vunpack.c.l.b16 %v1528
    %v1840 = vunpack.c.h.b16 %v1528
    %v1841 = vunpack.c.l.b16 %v1529
    %v1842 = vunpack.c.h.b16 %v1529
    %v1843 = vunpack.c.l.b16 %v1530
    %v1844 = vunpack.c.h.b16 %v1530
    %v1845 = vunpack.c.l.b16 %v1531
    %v1846 = vunpack.c.h.b16 %v1531
    %v1847 = vunpack.c.l.b16 %v1532
    %v1848 = vunpack.c.h.b16 %v1532
    %v1849 = vunpack.c.l.b16 %v1533
    %v1850 = vunpack.c.h.b16 %v1533
    %v1851 = vunpack.c.l.b16 %v1534
    %v1852 = vunpack.c.h.b16 %v1534
    %v1853 = vunpack.c.l.b16 %v1535
    %v1854 = vunpack.c.h.b16 %v1535
    %v1855 = vunpack.c.l.b16 %v1536
    %v1856 = vunpack.c.h.b16 %v1536
    %v1857 = vunpack.c.l.b16 %v1537
    %v1858 = vunpack.c.h.b16 %v1537
    %v1859 = vunpack.c.l.b16 %v1538
    %v1860 = vunpack.c.h.b16 %v1538
    %v1861 = vunpack.c.l.b16 %v1539
    %v1862 = vunpack.c.h.b16 %v1539
    %v1863 = vunpack.c.l.b16 %v1540
    %v1864 = vunpack.c.h.b16 %v1540
    %v1865 = vunpack.c.l.b16 %v1541
    %v1866 = vunpack.c.h.b16 %v1541
    %v1867 = vunpack.c.l.b16 %v1542
    %v1868 = vunpack.c.h.b16 %v1542
    %v1869 = vunpack.c.l.b16 %v1543
    %v1870 = vunpack.c.h.b16 %v1543
    %v1871 = vunpack.c.l.b16 %v1544
    %v1872 = vunpack.c.h.b16 %v1544
    %v1873 = vunpack.c.l.b16 %v1545
    %v1874 = vunpack.c.h.b16 %v1545
    %v1875 = vunpack.c.l.b16 %v1546
    %v1876 = vunpack.c.h.b16 %v1546
    %v1877 = vunpack.c.l.b16 %v1547
    %v1878 = vunpack.c.h.b16 %v1547
    %v1879 = vunpack.c.l.b16 %v1548
    %v1880 = vunpack.c.h.b16 %v1548
    %v1881 = vunpack.c.l.b16 %v1549
    %v1882 = vunpack.c.h.b16 %v1549
    %v1883 = vunpack.c.l.b16 %v1550
    %v1884 = vunpack.c.h.b16 %v1550
    %v1885 = vunpack.c.l.b16 %v1551
    %v1886 = vunpack.c.h.b16 %v1551
    %v1887 = vunpack.c.l.b16 %v1552
    %v1888 = vunpack.c.h.b16 %v1552
    %v1889 = vunpack.c.l.b16 %v1553
    %v1890 = vunpack.c.h.b16 %v1553
    %v1891 = vunpack.c.l.b16 %v1554
    %v1892 = vunpack.c.h.b16 %v1554
    %v1893 = vunpack.c.l.b16 %v1555
    %v1894 = vunpack.c.h.b16 %v1555
    %v1895 = vunpack.c.l.b16 %v1556
    %v1896 = vunpack.c.h.b16 %v1556
    %v1897 = vunpack.c.l.b16 %v1557
    %v1898 = vunpack.c.h.b16 %v1557
    %v1899 = vunpack.c.l.b16 %v1558
    %v1900 = vunpack.c.h.b16 %v1558
    %v1901 = vunpack.c.l.b16 %v1559
    %v1902 = vunpack.c.h.b16 %v1559
    %v1903 = vunpack.c.l.b16 %v1560
    %v1904 = vunpack.c.h.b16 %v1560
    %v1905 = vunpack.c.l.b16 %v1561
    %v1906 = vunpack.c.h.b16 %v1561
    %v1907 = vunpack.c.l.b16 %v1562
    %v1908 = vunpack.c.h.b16 %v1562
    %v1909 = vunpack.c.l.b16 %v1563
    %v1910 = vunpack.c.h.b16 %v1563
    %v1911 = vunpack.c.l.b16 %v1564
    %v1912 = vunpack.c.h.b16 %v1564
    %v1913 = vunpack.c.l.b16 %v1565
    %v1914 = vunpack.c.h.b16 %v1565
    %v1915 = vunpack.c.l.b16 %v1566
    %v1916 = vunpack.c.h.b16 %v1566
    %v1917 = vunpack.c.l.b16 %v1567
    %v1918 = vunpack.c.h.b16 %v1567
    %v1919 = vunpack.c.l.b16 %v1568
    %v1920 = vunpack.c.h.b16 %v1568
    %v1921 = vunpack.c.l.b16 %v1569
    %v1922 = vunpack.c.h.b16 %v1569
    %v1923 = vunpack.c.l.b16 %v1570
    %v1924 = vunpack.c.h.b16 %v1570
    %v1925 = vunpack.c.l.b16 %v1571
    %v1926 = vunpack.c.h.b16 %v1571
    %v1927 = vunpack.c.l.b16 %v1572
    %v1928 = vunpack.c.h.b16 %v1572
    %v1929 = vunpack.c.l.b16 %v1573
    %v1930 = vunpack.c.h.b16 %v1573
    %v1931 = vunpack.c.l.b16 %v1574
    %v1932 = vunpack.c.h.b16 %v1574
    %v1933 = vunpack.c.l.b16 %v1575
    %v1934 = vunpack.c.h.b16 %v1575
    %v1935 = vunpack.c.l.b16 %v1576
    %v1936 = vunpack.c.h.b16 %v1576
    %v1937 = vunpack.c.l.b16 %v1577
    %v1938 = vunpack.c.h.b16 %v1577
    %v1939 = vunpack.c.l.b16 %v1578
    %v1940 = vunpack.c.h.b16 %v1578
    %v1941 = vunpack.c.l.b16 %v1579
    %v1942 = vunpack.c.h.b16 %v1579
    %v1943 = vunpack.c.l.b16 %v1580
    %v1944 = vunpack.c.h.b16 %v1580
    %v1945 = vunpack.c.l.b16 %v1581
    %v1946 = vunpack.c.h.b16 %v1581
    %v1947 = vunpack.c.l.b16 %v1582
    %v1948 = vunpack.c.h.b16 %v1582
    %v1949 = vunpack.c.l.b16 %v1583
    %v1950 = vunpack.c.h.b16 %v1583
    %v1951 = vunpack.c.l.b16 %v1584
    %v1952 = vunpack.c.h.b16 %v1584
    %v1953 = vunpack.c.l.b16 %v1585
    %v1954 = vunpack.c.h.b16 %v1585
    %v1955 = vunpack.c.l.b16 %v1586
    %v1956 = vunpack.c.h.b16 %v1586
    %v1957 = vunpack.c.l.b16 %v1587
    %v1958 = vunpack.c.h.b16 %v1587
    %v1959 = vunpack.c.l.b16 %v1588
    %v1960 = vunpack.c.h.b16 %v1588
    %v1961 = vunpack.c.l.b16 %v1589
    %v1962 = vunpack.c.h.b16 %v1589
    %v1963 = vunpack.c.l.b16 %v1590
    %v1964 = vunpack.c.h.b16 %v1590
    %v1965 = vunpack.c.l.b16 %v1591
    %v1966 = vunpack.c.h.b16 %v1591
    %v1967 = vunpack.c.l.b16 %v1592
    %v1968 = vunpack.c.h.b16 %v1592
    %v1969 = vunpack.c.l.b16 %v1593
    %v1970 = vunpack.c.h.b16 %v1593
    %v1971 = vunpack.c.l.b16 %v1594
    %v1972 = vunpack.c.h.b16 %v1594
    %v1973 = vunpack.c.l.b16 %v1595
    %v1974 = vunpack.c.h.b16 %v1595
    %v1975 = vunpack.c.l.b16 %v1596
    %v1976 = vunpack.c.h.b16 %v1596
    %v1977 = vunpack.c.l.b16 %v1597
    %v1978 = vunpack.c.h.b16 %v1597
    %v1979 = vunpack.c.l.b16 %v1598
    %v1980 = vunpack.c.h.b16 %v1598
    %v1981 = vunpack.c.l.b16 %v1599
    %v1982 = vunpack.c.h.b16 %v1599
    %v1983 = vunpack.c.l.b16 %v1600
    %v1984 = vunpack.c.h.b16 %v1600
    %v1985 = vpack.c.b16 %v1799, %v1793
    %v1986 = vpack.c.b16 %v1800, %v1794
    %v1987 = vpack.c.b16 %v1801, %v1795
    %v1988 = vpack.c.b16 %v1802, %v1796
    %v1989 = vpack.c.b16 %v1803, %v1797
    %v1990 = vpack.c.b16 %v1804, %v1798
    %v1991 = vpack.c.b16 %v1811, %v1805
    %v1992 = vpack.c.b16 %v1812, %v1806
    %v1993 = vpack.c.b16 %v1813, %v1807
    %v1994 = vpack.c.b16 %v1814, %v1808
    %v1995 = vpack.c.b16 %v1815, %v1809
    %v1996 = vpack.c.b16 %v1816, %v1810
    %v1997 = vpack.c.b16 %v1823, %v1817
    %v1998 = vpack.c.b16 %v1824, %v1818
    %v1999 = vpack.c.b16 %v1825, %v1819
    %v2000 = vpack.c.b16 %v1826, %v1820
    %v2001 = vpack.c.b16 %v1827, %v1821
    %v2002 = vpack.c.b16 %v1828, %v1822
    %v2003 = vpack.c.b16 %v1835, %v1829
    %v2004 = vpack.c.b16 %v1836, %v1830
    %v2005 = vpack.c.b16 %v1837, %v1831
    %v2006 = vpack.c.b16 %v1838, %v1832
    %v2007 = vpack.c.b16 %v1839, %v1833
    %v2008 = vpack.c.b16 %v1840, %v1834
    %v2009 = vpack.c.b16 %v1847, %v1841
    %v2010 = vpack.c.b16 %v1848, %v1842
    %v2011 = vpack.c.b16 %v1849, %v1843
    %v2012 = vpack.c.b16 %v1850, %v1844
    %v2013 = vpack.c.b16 %v1851, %v1845
    %v2014 = vpack.c.b16 %v1852, %v1846
    %v2015 = vpack.c.b16 %v1859, %v1853
    %v2016 = vpack.c.b16 %v1860, %v1854
    %v2017 = vpack.c.b16 %v1861, %v1855
    %v2018 = vpack.c.b16 %v1862, %v1856
    %v2019 = vpack.c.b16 %v1863, %v1857
    %v2020 = vpack.c.b16 %v1864, %v1858
    %v2021 = vpack.c.b16 %v1871, %v1865
    %v2022 = vpack.c.b16 %v1872, %v1866
    %v2023 = vpack.c.b16 %v1873, %v1867
    %v2024 = vpack.c.b16 %v1874, %v1868
    %v2025 = vpack.c.b16 %v1875, %v1869
    %v2026 = vpack.c.b16 %v1876, %v1870
    %v2027 = vpack.c.b16 %v1883, %v1877
    %v2028 = vpack.c.b16 %v1884, %v1878
    %v2029 = vpack.c.b16 %v1885, %v1879
    %v2030 = vpack.c.b16 %v1886, %v1880
    %v2031 = vpack.c.b16 %v1887, %v1881
    %v2032 = vpack.c.b16 %v1888, %v1882
    %v2033 = vpack.c.b16 %v1895, %v1889
    %v2034 = vpack.c.b16 %v1896, %v1890
    %v2035 = vpack.c.b16 %v1897, %v1891
    %v2036 = vpack.c.b16 %v1898, %v1892
    %v2037 = vpack.c.b16 %v1899, %v1893
    %v2038 = vpack.c.b16 %v1900, %v1894
    %v2039 = vpack.c.b16 %v1907, %v1901
    %v2040 = vpack.c.b16 %v1908, %v1902
    %v2041 = vpack.c.b16 %v1909, %v1903
    %v2042 = vpack.c.b16 %v1910, %v1904
    %v2043 = vpack.c.b16 %v1911, %v1905
    %v2044 = vpack.c.b16 %v1912, %v1906
    %v2045 = vpack.c.b16 %v1919, %v1913
    %v2046 = vpack.c.b16 %v1920, %v1914
    %v2047 = vpack.c.b16 %v1921, %v1915
    %v2048 = vpack.c.b16 %v1922, %v1916
    %v2049 = vpack.c.b16 %v1923, %v1917
    %v2050 = vpack.c.b16 %v1924, %v1918
    %v2051 = vpack.c.b16 %v1931, %v1925
    %v2052 = vpack.c.b16 %v1932, %v1926
    %v2053 = vpack.c.b16 %v1933, %v1927
    %v2054 = vpack.c.b16 %v1934, %v1928
    %v2055 = vpack.c.b16 %v1935, %v1929
    %v2056 = vpack.c.b16 %v1936, %v1930
    %v2057 = vpack.c.b16 %v1943, %v1937
    %v2058 = vpack.c.b16 %v1944, %v1938
    %v2059 = vpack.c.b16 %v1945, %v1939
    %v2060 = vpack.c.b16 %v1946, %v1940
    %v2061 = vpack.c.b16 %v1947, %v1941
    %v2062 = vpack.c.b16 %v1948, %v1942
    %v2063 = vpack.c.b16 %v1955, %v1949
    %v2064 = vpack.c.b16 %v1956, %v1950
    %v2065 = vpack.c.b16 %v1957, %v1951
    %v2066 = vpack.c.b16 %v1958, %v1952
    %v2067 = vpack.c.b16 %v1959, %v1953
    %v2068 = vpack.c.b16 %v1960, %v1954
    %v2069 = vpack.c.b16 %v1967, %v1961
    %v2070 = vpack.c.b16 %v1968, %v1962
    %v2071 = vpack.c.b16 %v1969, %v1963
    %v2072 = vpack.c.b16 %v1970, %v1964
    %v2073 = vpack.c.b16 %v1971, %v1965
    %v2074 = vpack.c.b16 %v1972, %v1966
    %v2075 = vpack.c.b16 %v1979, %v1973
    %v2076 = vpack.c.b16 %v1980, %v1974
    %v2077 = vpack.c.b16 %v1981, %v1975
    %v2078 = vpack.c.b16 %v1982, %v1976
    %v2079 = vpack.c.b16 %v1983, %v1977
    %v2080 = vpack.c.b16 %v1984, %v1978
    %2177 = vmatprep.subr.bf16.mxu0 %v2028
    %2178 = vmatpush1.bf16.msra.mxu0 %v2027
    %2179 = vmatprep.subr.bf16.mxu0 %v2022
    %2180 = vmatpush1.bf16.msra.mxu0 %v2021
    %2181 = vmatprep.subr.bf16.mxu0 %v2016
    %2182 = vmatpush1.bf16.msra.mxu0 %v2015
    %2183 = vmatprep.subr.bf16.mxu0 %v2010
    %2184 = vmatpush1.bf16.msra.mxu0 %v2009
    %2185 = vmatprep.subr.bf16.mxu0 %v2004
    %2186 = vmatpush1.bf16.msra.mxu0 %v2003
    %2187 = vmatprep.subr.bf16.mxu0 %v1998
    %2188 = vmatpush1.bf16.msra.mxu0 %v1997
    %2189 = vmatprep.subr.bf16.mxu0 %v1992
    %2190 = vmatpush1.bf16.msra.mxu0 %v1991
    %2191 = vmatprep.subr.bf16.mxu0 %v1986
    %2192 = vmatpush1.bf16.msra.mxu0 %v1985
    %2193 = vmatprep.subr.bf16.mxu0 %v2076
    %2194 = vmatpush2.bf16.msra.mxu0 %v2075
    %2195 = vmatprep.subr.bf16.mxu0 %v2070
    %2196 = vmatpush2.bf16.msra.mxu0 %v2069
    %2197 = vmatprep.subr.bf16.mxu0 %v2064
    %2198 = vmatpush2.bf16.msra.mxu0 %v2063
    %2199 = vmatprep.subr.bf16.mxu0 %v2058
    %2200 = vmatpush2.bf16.msra.mxu0 %v2057
    %2201 = vmatprep.subr.bf16.mxu0 %v2052
    %2202 = vmatpush2.bf16.msra.mxu0 %v2051
    %2203 = vmatprep.subr.bf16.mxu0 %v2046
    %2204 = vmatpush2.bf16.msra.mxu0 %v2045
    %2205 = vmatprep.subr.bf16.mxu0 %v2040
    %2206 = vmatpush2.bf16.msra.mxu0 %v2039
    %2207 = vmatprep.subr.bf16.mxu0 %v2034
    %2208 = vmatpush2.bf16.msra.mxu0 %v2033
    %2209 = vmatprep.mubr.bf16.mxu0 %v1602
    %2210 = vmatmul.mubr.bf16.gmra.mxu0 %v1601
    %v2211 = vpop.f32.mrf.mxu0
    %v2212 = vadd.f32 0.0, %v2211
    %v2213 = vpop.f32.mrf.mxu0
    %v2214 = vadd.f32 0.0, %v2213
    %v2215 = vpop.f32.mrf.mxu0
    %v2216 = vadd.f32 0.0, %v2215
    %v2217 = vpop.f32.mrf.mxu0
    %v2218 = vadd.f32 0.0, %v2217
    %2219 = vmatprep.mubr.bf16.mxu0 %v1604
    %2220 = vmatmul.mubr.bf16.gmra.mxu0 %v1603
    %v2221 = vpop.f32.mrf.mxu0
    %v2222 = vadd.f32 0.0, %v2221
    %v2223 = vpop.f32.mrf.mxu0
    %v2224 = vadd.f32 0.0, %v2223
    %v2225 = vpop.f32.mrf.mxu0
    %v2226 = vadd.f32 0.0, %v2225
    %v2227 = vpop.f32.mrf.mxu0
    %v2228 = vadd.f32 0.0, %v2227
    %2229 = vmatprep.mubr.bf16.mxu0 %v1606
    %2230 = vmatmul.mubr.bf16.gmra.mxu0 %v1605
    %v2231 = vpop.f32.mrf.mxu0
    %v2232 = vadd.f32 0.0, %v2231
    %v2233 = vpop.f32.mrf.mxu0
    %v2234 = vadd.f32 0.0, %v2233
    %v2235 = vpop.f32.mrf.mxu0
    %v2236 = vadd.f32 0.0, %v2235
    %v2237 = vpop.f32.mrf.mxu0
    %v2238 = vadd.f32 0.0, %v2237
    %2239 = vmatprep.mubr.bf16.mxu0 %v1608
    %2240 = vmatmul.mubr.bf16.gmra.mxu0 %v1607
    %v2241 = vpop.f32.mrf.mxu0
    %v2242 = vadd.f32 0.0, %v2241
    %v2243 = vpop.f32.mrf.mxu0
    %v2244 = vadd.f32 0.0, %v2243
    %v2245 = vpop.f32.mrf.mxu0
    %v2246 = vadd.f32 0.0, %v2245
    %v2247 = vpop.f32.mrf.mxu0
    %v2248 = vadd.f32 0.0, %v2247
    %2249 = vmatprep.mubr.bf16.mxu0 %v1610
    %2250 = vmatmul.mubr.bf16.gmra.mxu0 %v1609
    %v2251 = vpop.f32.mrf.mxu0
    %v2252 = vadd.f32 0.0, %v2251
    %v2253 = vpop.f32.mrf.mxu0
    %v2254 = vadd.f32 0.0, %v2253
    %v2255 = vpop.f32.mrf.mxu0
    %v2256 = vadd.f32 0.0, %v2255
    %v2257 = vpop.f32.mrf.mxu0
    %v2258 = vadd.f32 0.0, %v2257
    %2259 = vmatprep.mubr.bf16.mxu0 %v1612
    %2260 = vmatmul.mubr.bf16.gmra.mxu0 %v1611
    %v2261 = vpop.f32.mrf.mxu0
    %v2262 = vadd.f32 0.0, %v2261
    %v2263 = vpop.f32.mrf.mxu0
    %v2264 = vadd.f32 0.0, %v2263
    %v2265 = vpop.f32.mrf.mxu0
    %v2266 = vadd.f32 0.0, %v2265
    %v2267 = vpop.f32.mrf.mxu0
    %v2268 = vadd.f32 0.0, %v2267
    %2269 = vmatprep.mubr.bf16.mxu0 %v1614
    %2270 = vmatmul.mubr.bf16.gmra.mxu0 %v1613
    %v2271 = vpop.f32.mrf.mxu0
    %v2272 = vadd.f32 0.0, %v2271
    %v2273 = vpop.f32.mrf.mxu0
    %v2274 = vadd.f32 0.0, %v2273
    %v2275 = vpop.f32.mrf.mxu0
    %v2276 = vadd.f32 0.0, %v2275
    %v2277 = vpop.f32.mrf.mxu0
    %v2278 = vadd.f32 0.0, %v2277
    %2279 = vmatprep.mubr.bf16.mxu0 %v1616
    %2280 = vmatmul.mubr.bf16.gmra.mxu0 %v1615
    %v2281 = vpop.f32.mrf.mxu0
    %v2282 = vadd.f32 0.0, %v2281
    %v2283 = vpop.f32.mrf.mxu0
    %v2284 = vadd.f32 0.0, %v2283
    %v2285 = vpop.f32.mrf.mxu0
    %v2286 = vadd.f32 0.0, %v2285
    %v2287 = vpop.f32.mrf.mxu0
    %v2288 = vadd.f32 0.0, %v2287
    %2289 = vmatprep.mubr.bf16.mxu0 %v1682
    %2290 = vmatmul.mubr.bf16.gmra.mxu0 %v1681
    %v2291 = vpop.f32.mrf.mxu0
    %v2292 = vadd.f32 0.0, %v2291
    %v2293 = vpop.f32.mrf.mxu0
    %v2294 = vadd.f32 0.0, %v2293
    %v2295 = vpop.f32.mrf.mxu0
    %v2296 = vadd.f32 0.0, %v2295
    %v2297 = vpop.f32.mrf.mxu0
    %v2298 = vadd.f32 0.0, %v2297
    %2299 = vmatprep.mubr.bf16.mxu0 %v1684
    %2300 = vmatmul.mubr.bf16.gmra.mxu0 %v1683
    %v2301 = vpop.f32.mrf.mxu0
    %v2302 = vadd.f32 0.0, %v2301
    %v2303 = vpop.f32.mrf.mxu0
    %v2304 = vadd.f32 0.0, %v2303
    %v2305 = vpop.f32.mrf.mxu0
    %v2306 = vadd.f32 0.0, %v2305
    %v2307 = vpop.f32.mrf.mxu0
    %v2308 = vadd.f32 0.0, %v2307
    %2309 = vmatprep.mubr.bf16.mxu0 %v1686
    %2310 = vmatmul.mubr.bf16.gmra.mxu0 %v1685
    %v2311 = vpop.f32.mrf.mxu0
    %v2312 = vadd.f32 0.0, %v2311
    %v2313 = vpop.f32.mrf.mxu0
    %v2314 = vadd.f32 0.0, %v2313
    %v2315 = vpop.f32.mrf.mxu0
    %v2316 = vadd.f32 0.0, %v2315
    %v2317 = vpop.f32.mrf.mxu0
    %v2318 = vadd.f32 0.0, %v2317
    %2319 = vmatprep.mubr.bf16.mxu0 %v1688
    %2320 = vmatmul.mubr.bf16.gmra.mxu0 %v1687
    %v2321 = vpop.f32.mrf.mxu0
    %v2322 = vadd.f32 0.0, %v2321
    %v2323 = vpop.f32.mrf.mxu0
    %v2324 = vadd.f32 0.0, %v2323
    %v2325 = vpop.f32.mrf.mxu0
    %v2326 = vadd.f32 0.0, %v2325
    %v2327 = vpop.f32.mrf.mxu0
    %v2328 = vadd.f32 0.0, %v2327
    %2329 = vmatprep.mubr.bf16.mxu0 %v1690
    %2330 = vmatmul.mubr.bf16.gmra.mxu0 %v1689
    %v2331 = vpop.f32.mrf.mxu0
    %v2332 = vadd.f32 0.0, %v2331
    %v2333 = vpop.f32.mrf.mxu0
    %v2334 = vadd.f32 0.0, %v2333
    %v2335 = vpop.f32.mrf.mxu0
    %v2336 = vadd.f32 0.0, %v2335
    %v2337 = vpop.f32.mrf.mxu0
    %v2338 = vadd.f32 0.0, %v2337
    %2339 = vmatprep.mubr.bf16.mxu0 %v1692
    %2340 = vmatmul.mubr.bf16.gmra.mxu0 %v1691
    %v2341 = vpop.f32.mrf.mxu0
    %v2342 = vadd.f32 0.0, %v2341
    %v2343 = vpop.f32.mrf.mxu0
    %v2344 = vadd.f32 0.0, %v2343
    %v2345 = vpop.f32.mrf.mxu0
    %v2346 = vadd.f32 0.0, %v2345
    %v2347 = vpop.f32.mrf.mxu0
    %v2348 = vadd.f32 0.0, %v2347
    %2349 = vmatprep.mubr.bf16.mxu0 %v1694
    %2350 = vmatmul.mubr.bf16.gmra.mxu0 %v1693
    %v2351 = vpop.f32.mrf.mxu0
    %v2352 = vadd.f32 0.0, %v2351
    %v2353 = vpop.f32.mrf.mxu0
    %v2354 = vadd.f32 0.0, %v2353
    %v2355 = vpop.f32.mrf.mxu0
    %v2356 = vadd.f32 0.0, %v2355
    %v2357 = vpop.f32.mrf.mxu0
    %v2358 = vadd.f32 0.0, %v2357
    %2359 = vmatprep.mubr.bf16.mxu0 %v1696
    %2360 = vmatmul.mubr.bf16.gmra.mxu0 %v1695
    %v2361 = vpop.f32.mrf.mxu0
    %v2362 = vadd.f32 0.0, %v2361
    %v2363 = vpop.f32.mrf.mxu0
    %v2364 = vadd.f32 0.0, %v2363
    %v2365 = vpop.f32.mrf.mxu0
    %v2366 = vadd.f32 0.0, %v2365
    %v2367 = vpop.f32.mrf.mxu0
    %v2368 = vadd.f32 0.0, %v2367
    %2369 = vdwg.mxu0
    %2370 = vmatprep.subr.bf16.mxu0 %v2030
    %2371 = vmatpush1.bf16.msra.mxu0 %v2029
    %2372 = vmatprep.subr.bf16.mxu0 %v2024
    %2373 = vmatpush1.bf16.msra.mxu0 %v2023
    %2374 = vmatprep.subr.bf16.mxu0 %v2018
    %2375 = vmatpush1.bf16.msra.mxu0 %v2017
    %2376 = vmatprep.subr.bf16.mxu0 %v2012
    %2377 = vmatpush1.bf16.msra.mxu0 %v2011
    %2378 = vmatprep.subr.bf16.mxu0 %v2006
    %2379 = vmatpush1.bf16.msra.mxu0 %v2005
    %2380 = vmatprep.subr.bf16.mxu0 %v2000
    %2381 = vmatpush1.bf16.msra.mxu0 %v1999
    %2382 = vmatprep.subr.bf16.mxu0 %v1994
    %2383 = vmatpush1.bf16.msra.mxu0 %v1993
    %2384 = vmatprep.subr.bf16.mxu0 %v1988
    %2385 = vmatpush1.bf16.msra.mxu0 %v1987
    %2386 = vmatprep.subr.bf16.mxu0 %v2078
    %2387 = vmatpush2.bf16.msra.mxu0 %v2077
    %2388 = vmatprep.subr.bf16.mxu0 %v2072
    %2389 = vmatpush2.bf16.msra.mxu0 %v2071
    %2390 = vmatprep.subr.bf16.mxu0 %v2066
    %2391 = vmatpush2.bf16.msra.mxu0 %v2065
    %2392 = vmatprep.subr.bf16.mxu0 %v2060
    %2393 = vmatpush2.bf16.msra.mxu0 %v2059
    %2394 = vmatprep.subr.bf16.mxu0 %v2054
    %2395 = vmatpush2.bf16.msra.mxu0 %v2053
    %2396 = vmatprep.subr.bf16.mxu0 %v2048
    %2397 = vmatpush2.bf16.msra.mxu0 %v2047
    %2398 = vmatprep.subr.bf16.mxu0 %v2042
    %2399 = vmatpush2.bf16.msra.mxu0 %v2041
    %2400 = vmatprep.subr.bf16.mxu0 %v2036
    %2401 = vmatpush2.bf16.msra.mxu0 %v2035
    %2402 = vmatprep.mubr.bf16.mxu0 %v1602
    %2403 = vmatmul.mubr.bf16.gmra.mxu0 %v1601
    %v2404 = vpop.f32.mrf.mxu0
    %v2405 = vadd.f32 0.0, %v2404
    %v2406 = vpop.f32.mrf.mxu0
    %v2407 = vadd.f32 0.0, %v2406
    %v2408 = vpop.f32.mrf.mxu0
    %v2409 = vadd.f32 0.0, %v2408
    %v2410 = vpop.f32.mrf.mxu0
    %v2411 = vadd.f32 0.0, %v2410
    %2412 = vmatprep.mubr.bf16.mxu0 %v1604
    %2413 = vmatmul.mubr.bf16.gmra.mxu0 %v1603
    %v2414 = vpop.f32.mrf.mxu0
    %v2415 = vadd.f32 0.0, %v2414
    %v2416 = vpop.f32.mrf.mxu0
    %v2417 = vadd.f32 0.0, %v2416
    %v2418 = vpop.f32.mrf.mxu0
    %v2419 = vadd.f32 0.0, %v2418
    %v2420 = vpop.f32.mrf.mxu0
    %v2421 = vadd.f32 0.0, %v2420
    %2422 = vmatprep.mubr.bf16.mxu0 %v1606
    %2423 = vmatmul.mubr.bf16.gmra.mxu0 %v1605
    %v2424 = vpop.f32.mrf.mxu0
    %v2425 = vadd.f32 0.0, %v2424
    %v2426 = vpop.f32.mrf.mxu0
    %v2427 = vadd.f32 0.0, %v2426
    %v2428 = vpop.f32.mrf.mxu0
    %v2429 = vadd.f32 0.0, %v2428
    %v2430 = vpop.f32.mrf.mxu0
    %v2431 = vadd.f32 0.0, %v2430
    %2432 = vmatprep.mubr.bf16.mxu0 %v1608
    %2433 = vmatmul.mubr.bf16.gmra.mxu0 %v1607
    %v2434 = vpop.f32.mrf.mxu0
    %v2435 = vadd.f32 0.0, %v2434
    %v2436 = vpop.f32.mrf.mxu0
    %v2437 = vadd.f32 0.0, %v2436
    %v2438 = vpop.f32.mrf.mxu0
    %v2439 = vadd.f32 0.0, %v2438
    %v2440 = vpop.f32.mrf.mxu0
    %v2441 = vadd.f32 0.0, %v2440
    %2442 = vmatprep.mubr.bf16.mxu0 %v1610
    %2443 = vmatmul.mubr.bf16.gmra.mxu0 %v1609
    %v2444 = vpop.f32.mrf.mxu0
    %v2445 = vadd.f32 0.0, %v2444
    %v2446 = vpop.f32.mrf.mxu0
    %v2447 = vadd.f32 0.0, %v2446
    %v2448 = vpop.f32.mrf.mxu0
    %v2449 = vadd.f32 0.0, %v2448
    %v2450 = vpop.f32.mrf.mxu0
    %v2451 = vadd.f32 0.0, %v2450
    %2452 = vmatprep.mubr.bf16.mxu0 %v1612
    %2453 = vmatmul.mubr.bf16.gmra.mxu0 %v1611
    %v2454 = vpop.f32.mrf.mxu0
    %v2455 = vadd.f32 0.0, %v2454
    %v2456 = vpop.f32.mrf.mxu0
    %v2457 = vadd.f32 0.0, %v2456
    %v2458 = vpop.f32.mrf.mxu0
    %v2459 = vadd.f32 0.0, %v2458
    %v2460 = vpop.f32.mrf.mxu0
    %v2461 = vadd.f32 0.0, %v2460
    %2462 = vmatprep.mubr.bf16.mxu0 %v1614
    %2463 = vmatmul.mubr.bf16.gmra.mxu0 %v1613
    %v2464 = vpop.f32.mrf.mxu0
    %v2465 = vadd.f32 0.0, %v2464
    %v2466 = vpop.f32.mrf.mxu0
    %v2467 = vadd.f32 0.0, %v2466
    %v2468 = vpop.f32.mrf.mxu0
    %v2469 = vadd.f32 0.0, %v2468
    %v2470 = vpop.f32.mrf.mxu0
    %v2471 = vadd.f32 0.0, %v2470
    %2472 = vmatprep.mubr.bf16.mxu0 %v1616
    %2473 = vmatmul.mubr.bf16.gmra.mxu0 %v1615
    %v2474 = vpop.f32.mrf.mxu0
    %v2475 = vadd.f32 0.0, %v2474
    %v2476 = vpop.f32.mrf.mxu0
    %v2477 = vadd.f32 0.0, %v2476
    %v2478 = vpop.f32.mrf.mxu0
    %v2479 = vadd.f32 0.0, %v2478
    %v2480 = vpop.f32.mrf.mxu0
    %v2481 = vadd.f32 0.0, %v2480
    %2482 = vmatprep.mubr.bf16.mxu0 %v1682
    %2483 = vmatmul.mubr.bf16.gmra.mxu0 %v1681
    %v2484 = vpop.f32.mrf.mxu0
    %v2485 = vadd.f32 0.0, %v2484
    %v2486 = vpop.f32.mrf.mxu0
    %v2487 = vadd.f32 0.0, %v2486
    %v2488 = vpop.f32.mrf.mxu0
    %v2489 = vadd.f32 0.0, %v2488
    %v2490 = vpop.f32.mrf.mxu0
    %v2491 = vadd.f32 0.0, %v2490
    %2492 = vmatprep.mubr.bf16.mxu0 %v1684
    %2493 = vmatmul.mubr.bf16.gmra.mxu0 %v1683
    %v2494 = vpop.f32.mrf.mxu0
    %v2495 = vadd.f32 0.0, %v2494
    %v2496 = vpop.f32.mrf.mxu0
    %v2497 = vadd.f32 0.0, %v2496
    %v2498 = vpop.f32.mrf.mxu0
    %v2499 = vadd.f32 0.0, %v2498
    %v2500 = vpop.f32.mrf.mxu0
    %v2501 = vadd.f32 0.0, %v2500
    %2502 = vmatprep.mubr.bf16.mxu0 %v1686
    %2503 = vmatmul.mubr.bf16.gmra.mxu0 %v1685
    %v2504 = vpop.f32.mrf.mxu0
    %v2505 = vadd.f32 0.0, %v2504
    %v2506 = vpop.f32.mrf.mxu0
    %v2507 = vadd.f32 0.0, %v2506
    %v2508 = vpop.f32.mrf.mxu0
    %v2509 = vadd.f32 0.0, %v2508
    %v2510 = vpop.f32.mrf.mxu0
    %v2511 = vadd.f32 0.0, %v2510
    %2512 = vmatprep.mubr.bf16.mxu0 %v1688
    %2513 = vmatmul.mubr.bf16.gmra.mxu0 %v1687
    %v2514 = vpop.f32.mrf.mxu0
    %v2515 = vadd.f32 0.0, %v2514
    %v2516 = vpop.f32.mrf.mxu0
    %v2517 = vadd.f32 0.0, %v2516
    %v2518 = vpop.f32.mrf.mxu0
    %v2519 = vadd.f32 0.0, %v2518
    %v2520 = vpop.f32.mrf.mxu0
    %v2521 = vadd.f32 0.0, %v2520
    %2522 = vmatprep.mubr.bf16.mxu0 %v1690
    %2523 = vmatmul.mubr.bf16.gmra.mxu0 %v1689
    %v2524 = vpop.f32.mrf.mxu0
    %v2525 = vadd.f32 0.0, %v2524
    %v2526 = vpop.f32.mrf.mxu0
    %v2527 = vadd.f32 0.0, %v2526
    %v2528 = vpop.f32.mrf.mxu0
    %v2529 = vadd.f32 0.0, %v2528
    %v2530 = vpop.f32.mrf.mxu0
    %v2531 = vadd.f32 0.0, %v2530
    %2532 = vmatprep.mubr.bf16.mxu0 %v1692
    %2533 = vmatmul.mubr.bf16.gmra.mxu0 %v1691
    %v2534 = vpop.f32.mrf.mxu0
    %v2535 = vadd.f32 0.0, %v2534
    %v2536 = vpop.f32.mrf.mxu0
    %v2537 = vadd.f32 0.0, %v2536
    %v2538 = vpop.f32.mrf.mxu0
    %v2539 = vadd.f32 0.0, %v2538
    %v2540 = vpop.f32.mrf.mxu0
    %v2541 = vadd.f32 0.0, %v2540
    %2542 = vmatprep.mubr.bf16.mxu0 %v1694
    %2543 = vmatmul.mubr.bf16.gmra.mxu0 %v1693
    %v2544 = vpop.f32.mrf.mxu0
    %v2545 = vadd.f32 0.0, %v2544
    %v2546 = vpop.f32.mrf.mxu0
    %v2547 = vadd.f32 0.0, %v2546
    %v2548 = vpop.f32.mrf.mxu0
    %v2549 = vadd.f32 0.0, %v2548
    %v2550 = vpop.f32.mrf.mxu0
    %v2551 = vadd.f32 0.0, %v2550
    %2552 = vmatprep.mubr.bf16.mxu0 %v1696
    %2553 = vmatmul.mubr.bf16.gmra.mxu0 %v1695
    %v2554 = vpop.f32.mrf.mxu0
    %v2555 = vadd.f32 0.0, %v2554
    %v2556 = vpop.f32.mrf.mxu0
    %v2557 = vadd.f32 0.0, %v2556
    %v2558 = vpop.f32.mrf.mxu0
    %v2559 = vadd.f32 0.0, %v2558
    %v2560 = vpop.f32.mrf.mxu0
    %v2561 = vadd.f32 0.0, %v2560
    %2562 = vdwg.mxu0
    %2563 = vmatprep.subr.bf16.mxu0 %v2032
    %2564 = vmatpush1.bf16.msra.mxu0 %v2031
    %2565 = vmatprep.subr.bf16.mxu0 %v2026
    %2566 = vmatpush1.bf16.msra.mxu0 %v2025
    %2567 = vmatprep.subr.bf16.mxu0 %v2020
    %2568 = vmatpush1.bf16.msra.mxu0 %v2019
    %2569 = vmatprep.subr.bf16.mxu0 %v2014
    %2570 = vmatpush1.bf16.msra.mxu0 %v2013
    %2571 = vmatprep.subr.bf16.mxu0 %v2008
    %2572 = vmatpush1.bf16.msra.mxu0 %v2007
    %2573 = vmatprep.subr.bf16.mxu0 %v2002
    %2574 = vmatpush1.bf16.msra.mxu0 %v2001
    %2575 = vmatprep.subr.bf16.mxu0 %v1996
    %2576 = vmatpush1.bf16.msra.mxu0 %v1995
    %2577 = vmatprep.subr.bf16.mxu0 %v1990
    %2578 = vmatpush1.bf16.msra.mxu0 %v1989
    %2579 = vmatprep.subr.bf16.mxu0 %v2080
    %2580 = vmatpush2.bf16.msra.mxu0 %v2079
    %2581 = vmatprep.subr.bf16.mxu0 %v2074
    %2582 = vmatpush2.bf16.msra.mxu0 %v2073
    %2583 = vmatprep.subr.bf16.mxu0 %v2068
    %2584 = vmatpush2.bf16.msra.mxu0 %v2067
    %2585 = vmatprep.subr.bf16.mxu0 %v2062
    %2586 = vmatpush2.bf16.msra.mxu0 %v2061
    %2587 = vmatprep.subr.bf16.mxu0 %v2056
    %2588 = vmatpush2.bf16.msra.mxu0 %v2055
    %2589 = vmatprep.subr.bf16.mxu0 %v2050
    %2590 = vmatpush2.bf16.msra.mxu0 %v2049
    %2591 = vmatprep.subr.bf16.mxu0 %v2044
    %2592 = vmatpush2.bf16.msra.mxu0 %v2043
    %2593 = vmatprep.subr.bf16.mxu0 %v2038
    %2594 = vmatpush2.bf16.msra.mxu0 %v2037
    %2595 = vmatprep.mubr.bf16.mxu0 %v1602
    %2596 = vmatmul.mubr.bf16.gmra.mxu0 %v1601
    %v2597 = vpop.f32.mrf.mxu0
    %v2598 = vadd.f32 0.0, %v2597
    %v2599 = vpop.f32.mrf.mxu0
    %v2600 = vadd.f32 0.0, %v2599
    %v2601 = vpop.f32.mrf.mxu0
    %v2602 = vadd.f32 0.0, %v2601
    %v2603 = vpop.f32.mrf.mxu0
    %v2604 = vadd.f32 0.0, %v2603
    %2605 = vmatprep.mubr.bf16.mxu0 %v1604
    %2606 = vmatmul.mubr.bf16.gmra.mxu0 %v1603
    %v2607 = vpop.f32.mrf.mxu0
    %v2608 = vadd.f32 0.0, %v2607
    %v2609 = vpop.f32.mrf.mxu0
    %v2610 = vadd.f32 0.0, %v2609
    %v2611 = vpop.f32.mrf.mxu0
    %v2612 = vadd.f32 0.0, %v2611
    %v2613 = vpop.f32.mrf.mxu0
    %v2614 = vadd.f32 0.0, %v2613
    %2615 = vmatprep.mubr.bf16.mxu0 %v1606
    %2616 = vmatmul.mubr.bf16.gmra.mxu0 %v1605
    %v2617 = vpop.f32.mrf.mxu0
    %v2618 = vadd.f32 0.0, %v2617
    %v2619 = vpop.f32.mrf.mxu0
    %v2620 = vadd.f32 0.0, %v2619
    %v2621 = vpop.f32.mrf.mxu0
    %v2622 = vadd.f32 0.0, %v2621
    %v2623 = vpop.f32.mrf.mxu0
    %v2624 = vadd.f32 0.0, %v2623
    %2625 = vmatprep.mubr.bf16.mxu0 %v1608
    %2626 = vmatmul.mubr.bf16.gmra.mxu0 %v1607
    %v2627 = vpop.f32.mrf.mxu0
    %v2628 = vadd.f32 0.0, %v2627
    %v2629 = vpop.f32.mrf.mxu0
    %v2630 = vadd.f32 0.0, %v2629
    %v2631 = vpop.f32.mrf.mxu0
    %v2632 = vadd.f32 0.0, %v2631
    %v2633 = vpop.f32.mrf.mxu0
    %v2634 = vadd.f32 0.0, %v2633
    %2635 = vmatprep.mubr.bf16.mxu0 %v1610
    %2636 = vmatmul.mubr.bf16.gmra.mxu0 %v1609
    %v2637 = vpop.f32.mrf.mxu0
    %v2638 = vadd.f32 0.0, %v2637
    %v2639 = vpop.f32.mrf.mxu0
    %v2640 = vadd.f32 0.0, %v2639
    %v2641 = vpop.f32.mrf.mxu0
    %v2642 = vadd.f32 0.0, %v2641
    %v2643 = vpop.f32.mrf.mxu0
    %v2644 = vadd.f32 0.0, %v2643
    %2645 = vmatprep.mubr.bf16.mxu0 %v1612
    %2646 = vmatmul.mubr.bf16.gmra.mxu0 %v1611
    %v2647 = vpop.f32.mrf.mxu0
    %v2648 = vadd.f32 0.0, %v2647
    %v2649 = vpop.f32.mrf.mxu0
    %v2650 = vadd.f32 0.0, %v2649
    %v2651 = vpop.f32.mrf.mxu0
    %v2652 = vadd.f32 0.0, %v2651
    %v2653 = vpop.f32.mrf.mxu0
    %v2654 = vadd.f32 0.0, %v2653
    %2655 = vmatprep.mubr.bf16.mxu0 %v1614
    %2656 = vmatmul.mubr.bf16.gmra.mxu0 %v1613
    %v2657 = vpop.f32.mrf.mxu0
    %v2658 = vadd.f32 0.0, %v2657
    %v2659 = vpop.f32.mrf.mxu0
    %v2660 = vadd.f32 0.0, %v2659
    %v2661 = vpop.f32.mrf.mxu0
    %v2662 = vadd.f32 0.0, %v2661
    %v2663 = vpop.f32.mrf.mxu0
    %v2664 = vadd.f32 0.0, %v2663
    %2665 = vmatprep.mubr.bf16.mxu0 %v1616
    %2666 = vmatmul.mubr.bf16.gmra.mxu0 %v1615
    %v2667 = vpop.f32.mrf.mxu0
    %v2668 = vadd.f32 0.0, %v2667
    %v2669 = vpop.f32.mrf.mxu0
    %v2670 = vadd.f32 0.0, %v2669
    %v2671 = vpop.f32.mrf.mxu0
    %v2672 = vadd.f32 0.0, %v2671
    %v2673 = vpop.f32.mrf.mxu0
    %v2674 = vadd.f32 0.0, %v2673
    %2675 = vmatprep.mubr.bf16.mxu0 %v1682
    %2676 = vmatmul.mubr.bf16.gmra.mxu0 %v1681
    %v2677 = vpop.f32.mrf.mxu0
    %v2678 = vadd.f32 0.0, %v2677
    %v2679 = vpop.f32.mrf.mxu0
    %v2680 = vadd.f32 0.0, %v2679
    %v2681 = vpop.f32.mrf.mxu0
    %v2682 = vadd.f32 0.0, %v2681
    %v2683 = vpop.f32.mrf.mxu0
    %v2684 = vadd.f32 0.0, %v2683
    %2685 = vmatprep.mubr.bf16.mxu0 %v1684
    %2686 = vmatmul.mubr.bf16.gmra.mxu0 %v1683
    %v2687 = vpop.f32.mrf.mxu0
    %v2688 = vadd.f32 0.0, %v2687
    %v2689 = vpop.f32.mrf.mxu0
    %v2690 = vadd.f32 0.0, %v2689
    %v2691 = vpop.f32.mrf.mxu0
    %v2692 = vadd.f32 0.0, %v2691
    %v2693 = vpop.f32.mrf.mxu0
    %v2694 = vadd.f32 0.0, %v2693
    %2695 = vmatprep.mubr.bf16.mxu0 %v1686
    %2696 = vmatmul.mubr.bf16.gmra.mxu0 %v1685
    %v2697 = vpop.f32.mrf.mxu0
    %v2698 = vadd.f32 0.0, %v2697
    %v2699 = vpop.f32.mrf.mxu0
    %v2700 = vadd.f32 0.0, %v2699
    %v2701 = vpop.f32.mrf.mxu0
    %v2702 = vadd.f32 0.0, %v2701
    %v2703 = vpop.f32.mrf.mxu0
    %v2704 = vadd.f32 0.0, %v2703
    %2705 = vmatprep.mubr.bf16.mxu0 %v1688
    %2706 = vmatmul.mubr.bf16.gmra.mxu0 %v1687
    %v2707 = vpop.f32.mrf.mxu0
    %v2708 = vadd.f32 0.0, %v2707
    %v2709 = vpop.f32.mrf.mxu0
    %v2710 = vadd.f32 0.0, %v2709
    %v2711 = vpop.f32.mrf.mxu0
    %v2712 = vadd.f32 0.0, %v2711
    %v2713 = vpop.f32.mrf.mxu0
    %v2714 = vadd.f32 0.0, %v2713
    %2715 = vmatprep.mubr.bf16.mxu0 %v1690
    %2716 = vmatmul.mubr.bf16.gmra.mxu0 %v1689
    %v2717 = vpop.f32.mrf.mxu0
    %v2718 = vadd.f32 0.0, %v2717
    %v2719 = vpop.f32.mrf.mxu0
    %v2720 = vadd.f32 0.0, %v2719
    %v2721 = vpop.f32.mrf.mxu0
    %v2722 = vadd.f32 0.0, %v2721
    %v2723 = vpop.f32.mrf.mxu0
    %v2724 = vadd.f32 0.0, %v2723
    %2725 = vmatprep.mubr.bf16.mxu0 %v1692
    %2726 = vmatmul.mubr.bf16.gmra.mxu0 %v1691
    %v2727 = vpop.f32.mrf.mxu0
    %v2728 = vadd.f32 0.0, %v2727
    %v2729 = vpop.f32.mrf.mxu0
    %v2730 = vadd.f32 0.0, %v2729
    %v2731 = vpop.f32.mrf.mxu0
    %v2732 = vadd.f32 0.0, %v2731
    %v2733 = vpop.f32.mrf.mxu0
    %v2734 = vadd.f32 0.0, %v2733
    %2735 = vmatprep.mubr.bf16.mxu0 %v1694
    %2736 = vmatmul.mubr.bf16.gmra.mxu0 %v1693
    %v2737 = vpop.f32.mrf.mxu0
    %v2738 = vadd.f32 0.0, %v2737
    %v2739 = vpop.f32.mrf.mxu0
    %v2740 = vadd.f32 0.0, %v2739
    %v2741 = vpop.f32.mrf.mxu0
    %v2742 = vadd.f32 0.0, %v2741
    %v2743 = vpop.f32.mrf.mxu0
    %v2744 = vadd.f32 0.0, %v2743
    %2745 = vmatprep.mubr.bf16.mxu0 %v1696
    %2746 = vmatmul.mubr.bf16.gmra.mxu0 %v1695
    %v2747 = vpop.f32.mrf.mxu0
    %v2748 = vadd.f32 0.0, %v2747
    %v2749 = vpop.f32.mrf.mxu0
    %v2750 = vadd.f32 0.0, %v2749
    %v2751 = vpop.f32.mrf.mxu0
    %v2752 = vadd.f32 0.0, %v2751
    %v2753 = vpop.f32.mrf.mxu0
    %v2754 = vadd.f32 0.0, %v2753
    %2755 = vdwg.mxu0
    %v2756 = vadd.f32 %v2212, %v2292
    %v2757 = vadd.f32 %v2214, %v2294
    %v2758 = vadd.f32 %v2405, %v2485
    %v2759 = vadd.f32 %v2407, %v2487
    %v2760 = vadd.f32 %v2598, %v2678
    %v2761 = vadd.f32 %v2600, %v2680
    %v2762 = vadd.f32 %v2216, %v2296
    %v2763 = vadd.f32 %v2218, %v2298
    %v2764 = vadd.f32 %v2409, %v2489
    %v2765 = vadd.f32 %v2411, %v2491
    %v2766 = vadd.f32 %v2602, %v2682
    %v2767 = vadd.f32 %v2604, %v2684
    %v2768 = vadd.f32 %v2222, %v2302
    %v2769 = vadd.f32 %v2224, %v2304
    %v2770 = vadd.f32 %v2415, %v2495
    %v2771 = vadd.f32 %v2417, %v2497
    %v2772 = vadd.f32 %v2608, %v2688
    %v2773 = vadd.f32 %v2610, %v2690
    %v2774 = vadd.f32 %v2226, %v2306
    %v2775 = vadd.f32 %v2228, %v2308
    %v2776 = vadd.f32 %v2419, %v2499
    %v2777 = vadd.f32 %v2421, %v2501
    %v2778 = vadd.f32 %v2612, %v2692
    %v2779 = vadd.f32 %v2614, %v2694
    %v2780 = vadd.f32 %v2232, %v2312
    %v2781 = vadd.f32 %v2234, %v2314
    %v2782 = vadd.f32 %v2425, %v2505
    %v2783 = vadd.f32 %v2427, %v2507
    %v2784 = vadd.f32 %v2618, %v2698
    %v2785 = vadd.f32 %v2620, %v2700
    %v2786 = vadd.f32 %v2236, %v2316
    %v2787 = vadd.f32 %v2238, %v2318
    %v2788 = vadd.f32 %v2429, %v2509
    %v2789 = vadd.f32 %v2431, %v2511
    %v2790 = vadd.f32 %v2622, %v2702
    %v2791 = vadd.f32 %v2624, %v2704
    %v2792 = vadd.f32 %v2242, %v2322
    %v2793 = vadd.f32 %v2244, %v2324
    %v2794 = vadd.f32 %v2435, %v2515
    %v2795 = vadd.f32 %v2437, %v2517
    %v2796 = vadd.f32 %v2628, %v2708
    %v2797 = vadd.f32 %v2630, %v2710
    %v2798 = vadd.f32 %v2246, %v2326
    %v2799 = vadd.f32 %v2248, %v2328
    %v2800 = vadd.f32 %v2439, %v2519
    %v2801 = vadd.f32 %v2441, %v2521
    %v2802 = vadd.f32 %v2632, %v2712
    %v2803 = vadd.f32 %v2634, %v2714
    %v2804 = vadd.f32 %v2252, %v2332
    %v2805 = vadd.f32 %v2254, %v2334
    %v2806 = vadd.f32 %v2445, %v2525
    %v2807 = vadd.f32 %v2447, %v2527
    %v2808 = vadd.f32 %v2638, %v2718
    %v2809 = vadd.f32 %v2640, %v2720
    %v2810 = vadd.f32 %v2256, %v2336
    %v2811 = vadd.f32 %v2258, %v2338
    %v2812 = vadd.f32 %v2449, %v2529
    %v2813 = vadd.f32 %v2451, %v2531
    %v2814 = vadd.f32 %v2642, %v2722
    %v2815 = vadd.f32 %v2644, %v2724
    %v2816 = vadd.f32 %v2262, %v2342
    %v2817 = vadd.f32 %v2264, %v2344
    %v2818 = vadd.f32 %v2455, %v2535
    %v2819 = vadd.f32 %v2457, %v2537
    %v2820 = vadd.f32 %v2648, %v2728
    %v2821 = vadd.f32 %v2650, %v2730
    %v2822 = vadd.f32 %v2266, %v2346
    %v2823 = vadd.f32 %v2268, %v2348
    %v2824 = vadd.f32 %v2459, %v2539
    %v2825 = vadd.f32 %v2461, %v2541
    %v2826 = vadd.f32 %v2652, %v2732
    %v2827 = vadd.f32 %v2654, %v2734
    %v2828 = vadd.f32 %v2272, %v2352
    %v2829 = vadd.f32 %v2274, %v2354
    %v2830 = vadd.f32 %v2465, %v2545
    %v2831 = vadd.f32 %v2467, %v2547
    %v2832 = vadd.f32 %v2658, %v2738
    %v2833 = vadd.f32 %v2660, %v2740
    %v2834 = vadd.f32 %v2276, %v2356
    %v2835 = vadd.f32 %v2278, %v2358
    %v2836 = vadd.f32 %v2469, %v2549
    %v2837 = vadd.f32 %v2471, %v2551
    %v2838 = vadd.f32 %v2662, %v2742
    %v2839 = vadd.f32 %v2664, %v2744
    %v2840 = vadd.f32 %v2282, %v2362
    %v2841 = vadd.f32 %v2284, %v2364
    %v2842 = vadd.f32 %v2475, %v2555
    %v2843 = vadd.f32 %v2477, %v2557
    %v2844 = vadd.f32 %v2668, %v2748
    %v2845 = vadd.f32 %v2670, %v2750
    %v2846 = vadd.f32 %v2286, %v2366
    %v2847 = vadd.f32 %v2288, %v2368
    %v2848 = vadd.f32 %v2479, %v2559
    %v2849 = vadd.f32 %v2481, %v2561
    %v2850 = vadd.f32 %v2672, %v2752
    %v2851 = vadd.f32 %v2674, %v2754
    %v2852 = vmax.f32 %v2756, %v2758
    %v2853 = vmax.f32 %v2757, %v2759
    %v2854 = vmax.f32 %v2762, %v2764
    %v2855 = vmax.f32 %v2763, %v2765
    %v2856 = vmax.f32 %v2768, %v2770
    %v2857 = vmax.f32 %v2769, %v2771
    %v2858 = vmax.f32 %v2774, %v2776
    %v2859 = vmax.f32 %v2775, %v2777
    %v2860 = vmax.f32 %v2780, %v2782
    %v2861 = vmax.f32 %v2781, %v2783
    %v2862 = vmax.f32 %v2786, %v2788
    %v2863 = vmax.f32 %v2787, %v2789
    %v2864 = vmax.f32 %v2792, %v2794
    %v2865 = vmax.f32 %v2793, %v2795
    %v2866 = vmax.f32 %v2798, %v2800
    %v2867 = vmax.f32 %v2799, %v2801
    %v2868 = vmax.f32 %v2804, %v2806
    %v2869 = vmax.f32 %v2805, %v2807
    %v2870 = vmax.f32 %v2810, %v2812
    %v2871 = vmax.f32 %v2811, %v2813
    %v2872 = vmax.f32 %v2816, %v2818
    %v2873 = vmax.f32 %v2817, %v2819
    %v2874 = vmax.f32 %v2822, %v2824
    %v2875 = vmax.f32 %v2823, %v2825
    %v2876 = vmax.f32 %v2828, %v2830
    %v2877 = vmax.f32 %v2829, %v2831
    %v2878 = vmax.f32 %v2834, %v2836
    %v2879 = vmax.f32 %v2835, %v2837
    %v2880 = vmax.f32 %v2840, %v2842
    %v2881 = vmax.f32 %v2841, %v2843
    %v2882 = vmax.f32 %v2846, %v2848
    %v2883 = vmax.f32 %v2847, %v2849
    %v2884 = vmax.f32 %v2852, %v2760
    %v2885 = vmax.f32 %v2853, %v2761
    %v2886 = vmax.f32 %v2854, %v2766
    %v2887 = vmax.f32 %v2855, %v2767
    %v2888 = vmax.f32 %v2856, %v2772
    %v2889 = vmax.f32 %v2857, %v2773
    %v2890 = vmax.f32 %v2858, %v2778
    %v2891 = vmax.f32 %v2859, %v2779
    %v2892 = vmax.f32 %v2860, %v2784
    %v2893 = vmax.f32 %v2861, %v2785
    %v2894 = vmax.f32 %v2862, %v2790
    %v2895 = vmax.f32 %v2863, %v2791
    %v2896 = vmax.f32 %v2864, %v2796
    %v2897 = vmax.f32 %v2865, %v2797
    %v2898 = vmax.f32 %v2866, %v2802
    %v2899 = vmax.f32 %v2867, %v2803
    %v2900 = vmax.f32 %v2868, %v2808
    %v2901 = vmax.f32 %v2869, %v2809
    %v2902 = vmax.f32 %v2870, %v2814
    %v2903 = vmax.f32 %v2871, %v2815
    %v2904 = vmax.f32 %v2872, %v2820
    %v2905 = vmax.f32 %v2873, %v2821
    %v2906 = vmax.f32 %v2874, %v2826
    %v2907 = vmax.f32 %v2875, %v2827
    %v2908 = vmax.f32 %v2876, %v2832
    %v2909 = vmax.f32 %v2877, %v2833
    %v2910 = vmax.f32 %v2878, %v2838
    %v2911 = vmax.f32 %v2879, %v2839
    %v2912 = vmax.f32 %v2880, %v2844
    %v2913 = vmax.f32 %v2881, %v2845
    %v2914 = vmax.f32 %v2882, %v2850
    %v2915 = vmax.f32 %v2883, %v2851
    %v2916 = vld [vmem:[%s3] sm:$0xff]
    %v2917 = vld [vmem:[%s3 + $0x8] sm:$0xff]
    %v2918 = vld [vmem:[%s3 + $0x10] sm:$0xff]
    %v2919 = vld [vmem:[%s3 + $0x18] sm:$0xff]
    %v2920 = vld [vmem:[%s3 + $0x20] sm:$0xff]
    %v2921 = vld [vmem:[%s3 + $0x28] sm:$0xff]
    %v2922 = vld [vmem:[%s3 + $0x30] sm:$0xff]
    %v2923 = vld [vmem:[%s3 + $0x38] sm:$0xff]
    %v2924 = vld [vmem:[%s4] sm:$0xff]
    %v2925 = vld [vmem:[%s4 + $0x8] sm:$0xff]
    %v2926 = vld [vmem:[%s4 + $0x10] sm:$0xff]
    %v2927 = vld [vmem:[%s4 + $0x18] sm:$0xff]
    %v2928 = vld [vmem:[%s4 + $0x20] sm:$0xff]
    %v2929 = vld [vmem:[%s4 + $0x28] sm:$0xff]
    %v2930 = vld [vmem:[%s4 + $0x30] sm:$0xff]
    %v2931 = vld [vmem:[%s4 + $0x38] sm:$0xff]
    %2933 = vset.pattern.permute.xlu0 0
    %2934 = vperm.xlu0 %2933, %v2924
    %v2935 = vpop.permute.xlu0 %2934
    %2938 = vset.pattern.permute.xlu0 0
    %2939 = vperm.xlu0 %2938, %v2925
    %v2940 = vpop.permute.xlu0 %2939
    %2943 = vset.pattern.permute.xlu0 0
    %2944 = vperm.xlu0 %2943, %v2926
    %v2945 = vpop.permute.xlu0 %2944
    %2948 = vset.pattern.permute.xlu0 0
    %2949 = vperm.xlu0 %2948, %v2927
    %v2950 = vpop.permute.xlu0 %2949
    %2953 = vset.pattern.permute.xlu0 0
    %2954 = vperm.xlu0 %2953, %v2928
    %v2955 = vpop.permute.xlu0 %2954
    %2958 = vset.pattern.permute.xlu0 0
    %2959 = vperm.xlu0 %2958, %v2929
    %v2960 = vpop.permute.xlu0 %2959
    %2963 = vset.pattern.permute.xlu0 0
    %2964 = vperm.xlu0 %2963, %v2930
    %v2965 = vpop.permute.xlu0 %2964
    %2968 = vset.pattern.permute.xlu0 0
    %2969 = vperm.xlu0 %2968, %v2931
    %v2970 = vpop.permute.xlu0 %2969
    %2972 = vmatprep.subr.mxu0 %v2915
    %2973 = vmatpush1.msra.mxu0 %v2914
    %2974 = vmatprep.subr.mxu0 %v2913
    %2975 = vmatpush1.msra.mxu0 %v2912
    %2976 = vmatprep.subr.mxu0 %v2911
    %2977 = vmatpush1.msra.mxu0 %v2910
    %2978 = vmatprep.subr.mxu0 %v2909
    %2979 = vmatpush1.msra.mxu0 %v2908
    %2980 = vmatprep.subr.mxu0 %v2907
    %2981 = vmatpush1.msra.mxu0 %v2906
    %2982 = vmatprep.subr.mxu0 %v2905
    %2983 = vmatpush1.msra.mxu0 %v2904
    %2984 = vmatprep.subr.mxu0 %v2903
    %2985 = vmatpush1.msra.mxu0 %v2902
    %2986 = vmatprep.subr.mxu0 %v2901
    %2987 = vmatpush1.msra.mxu0 %v2900
    %2988 = vmatprep.subr.mxu0 %v2899
    %2989 = vmatpush1.msra.mxu0 %v2898
    %2990 = vmatprep.subr.mxu0 %v2897
    %2991 = vmatpush1.msra.mxu0 %v2896
    %2992 = vmatprep.subr.mxu0 %v2895
    %2993 = vmatpush1.msra.mxu0 %v2894
    %2994 = vmatprep.subr.mxu0 %v2893
    %2995 = vmatpush1.msra.mxu0 %v2892
    %2996 = vmatprep.subr.mxu0 %v2891
    %2997 = vmatpush1.msra.mxu0 %v2890
    %2998 = vmatprep.subr.mxu0 %v2889
    %2999 = vmatpush1.msra.mxu0 %v2888
    %3000 = vmatprep.subr.mxu0 %v2887
    %3001 = vmatpush1.msra.mxu0 %v2886
    %3002 = vmatprep.subr.mxu0 %v2885
    %3003 = vmatpush1.msra.mxu0 %v2884
    %3004 = vmatprep.subr.mxu0 0.0
    %3005 = vmatpush2.msra.mxu0 0.0
    %3006 = vmatprep.subr.mxu0 0.0
    %3007 = vmatpush2.msra.mxu0 0.0
    %3008 = vmatprep.subr.mxu0 0.0
    %3009 = vmatpush2.msra.mxu0 0.0
    %3010 = vmatprep.subr.mxu0 0.0
    %3011 = vmatpush2.msra.mxu0 0.0
    %3012 = vmatprep.subr.mxu0 0.0
    %3013 = vmatpush2.msra.mxu0 0.0
    %3014 = vmatprep.subr.mxu0 0.0
    %3015 = vmatpush2.msra.mxu0 0.0
    %3016 = vmatprep.subr.mxu0 0.0
    %3017 = vmatpush2.msra.mxu0 0.0
    %3018 = vmatprep.subr.mxu0 0.0
    %3019 = vmatpush2.msra.mxu0 0.0
    %3020 = vmatprep.subr.mxu0 0.0
    %3021 = vmatpush2.msra.mxu0 0.0
    %3022 = vmatprep.subr.mxu0 0.0
    %3023 = vmatpush2.msra.mxu0 0.0
    %3024 = vmatprep.subr.mxu0 0.0
    %3025 = vmatpush2.msra.mxu0 0.0
    %3026 = vmatprep.subr.mxu0 0.0
    %3027 = vmatpush2.msra.mxu0 0.0
    %3028 = vmatprep.subr.mxu0 0.0
    %3029 = vmatpush2.msra.mxu0 0.0
    %3030 = vmatprep.subr.mxu0 0.0
    %3031 = vmatpush2.msra.mxu0 0.0
    %3032 = vmatprep.subr.mxu0 0.0
    %3033 = vmatpush2.msra.mxu0 0.0
    %3034 = vmatprep.subr.mxu0 0.0
    %3035 = vmatpush2.msra.mxu0 0.0
    %3036 = vmatprep.mubr.f32.mxu0 0.0
    %3037 = vmatmul.mubr.f32.gmra.mxu0 %v2916
    %v3038 = vpop.f32.mrf.mxu0
    %v3039 = vadd.f32 %v2935, %v3038
    %v3040 = vpop.f32.mrf.mxu0
    %v3041 = vadd.f32 %v2935, %v3040
    %3042 = vmatprep.mubr.f32.mxu0 0.0
    %3043 = vmatmul.mubr.f32.gmra.mxu0 %v2917
    %v3044 = vpop.f32.mrf.mxu0
    %v3045 = vadd.f32 %v2940, %v3044
    %v3046 = vpop.f32.mrf.mxu0
    %v3047 = vadd.f32 %v2940, %v3046
    %3048 = vmatprep.mubr.f32.mxu0 0.0
    %3049 = vmatmul.mubr.f32.gmra.mxu0 %v2918
    %v3050 = vpop.f32.mrf.mxu0
    %v3051 = vadd.f32 %v2945, %v3050
    %v3052 = vpop.f32.mrf.mxu0
    %v3053 = vadd.f32 %v2945, %v3052
    %3054 = vmatprep.mubr.f32.mxu0 0.0
    %3055 = vmatmul.mubr.f32.gmra.mxu0 %v2919
    %v3056 = vpop.f32.mrf.mxu0
    %v3057 = vadd.f32 %v2950, %v3056
    %v3058 = vpop.f32.mrf.mxu0
    %v3059 = vadd.f32 %v2950, %v3058
    %3060 = vmatprep.mubr.f32.mxu0 0.0
    %3061 = vmatmul.mubr.f32.gmra.mxu0 %v2920
    %v3062 = vpop.f32.mrf.mxu0
    %v3063 = vadd.f32 %v2955, %v3062
    %v3064 = vpop.f32.mrf.mxu0
    %v3065 = vadd.f32 %v2955, %v3064
    %3066 = vmatprep.mubr.f32.mxu0 0.0
    %3067 = vmatmul.mubr.f32.gmra.mxu0 %v2921
    %v3068 = vpop.f32.mrf.mxu0
    %v3069 = vadd.f32 %v2960, %v3068
    %v3070 = vpop.f32.mrf.mxu0
    %v3071 = vadd.f32 %v2960, %v3070
    %3072 = vmatprep.mubr.f32.mxu0 0.0
    %3073 = vmatmul.mubr.f32.gmra.mxu0 %v2922
    %v3074 = vpop.f32.mrf.mxu0
    %v3075 = vadd.f32 %v2965, %v3074
    %v3076 = vpop.f32.mrf.mxu0
    %v3077 = vadd.f32 %v2965, %v3076
    %3078 = vmatprep.mubr.f32.mxu0 0.0
    %3079 = vmatmul.mubr.f32.gmra.mxu0 %v2923
    %v3080 = vpop.f32.mrf.mxu0
    %v3081 = vadd.f32 %v2970, %v3080
    %v3082 = vpop.f32.mrf.mxu0
    %v3083 = vadd.f32 %v2970, %v3082
    %3084 = vdwg.mxu0
    %3085 = vst [vmem:[#allocation8] sm:$0xff] %v3039
    %3086 = vst [vmem:[#allocation8 + $0x8] sm:$0xff] %v3041
    %3087 = vst [vmem:[#allocation8 + $0x10] sm:$0xff] %v3045
    %3088 = vst [vmem:[#allocation8 + $0x18] sm:$0xff] %v3047
    %3089 = vst [vmem:[#allocation8 + $0x20] sm:$0xff] %v3051
    %3090 = vst [vmem:[#allocation8 + $0x28] sm:$0xff] %v3053
    %3091 = vst [vmem:[#allocation8 + $0x30] sm:$0xff] %v3057
    %3092 = vst [vmem:[#allocation8 + $0x38] sm:$0xff] %v3059
    %3093 = vst [vmem:[#allocation8 + $0x40] sm:$0xff] %v3063
    %3094 = vst [vmem:[#allocation8 + $0x48] sm:$0xff] %v3065
    %3095 = vst [vmem:[#allocation8 + $0x50] sm:$0xff] %v3069
    %3096 = vst [vmem:[#allocation8 + $0x58] sm:$0xff] %v3071
    %3097 = vst [vmem:[#allocation8 + $0x60] sm:$0xff] %v3075
    %3098 = vst [vmem:[#allocation8 + $0x68] sm:$0xff] %v3077
    %3099 = vst [vmem:[#allocation8 + $0x70] sm:$0xff] %v3081
    %3100 = vst [vmem:[#allocation8 + $0x78] sm:$0xff] %v3083
    // Predicated region
    $region34: #{tpu_custom_call.1} parent=1 // pred_check
      _
    $region35: #{tpu_custom_call.1} parent=1 // pred_check_branch
      %3102 = sbr.rel (0) target = $region37
    $region36: #{tpu_custom_call.1} parent=1 // pred_region
      %s3104 = ssub.s32 2048, 2048
      %3105 = vsyncadd [#allocation4], %s3104
      %s3106 = sshll.u32 [#allocation8], 4
      %s3107 = int_to_ptr.vmem [resolvable:$true] %s3106
      %3112 = dma.vmem_to_hbm [thread:$0]  %s3107, 2048, %s5, [#allocation4], 256, 256, 16
    $region37: #{tpu_custom_call.1} parent=1 // pred_fallthru
      _
    // Predicated region
    $region38: #{tpu_custom_call.1} parent=1 // pred_check
      _
    $region39: #{tpu_custom_call.1} parent=1 // pred_check_branch
      %3114 = sbr.rel (0) target = $region41
    $region40: #{tpu_custom_call.1} parent=1 // pred_region
      %3115 = dma.done [#allocation4], 2048
    $region41: #{tpu_custom_call.1} parent=1 // pred_fallthru
      _
    %3116 = vsyncpa [#allocation3], 1
    %3117 = vsyncpa [#allocation6], 1
    %3118 = vsyncpa [#allocation4], 1

</llo_original>
